<compile_context>
chip_gen: v7x
topology: tpu7x:2x2x1
jax: 0.10.0
libtpu: 0.0.40
codegen_flags: <defaults>
</compile_context>

<pallas_src>
import jax
import jax.numpy as jnp
from jax import lax
from jax.experimental import pallas as pl
from jax.experimental.pallas import tpu as pltpu


def resblock_kernel(x_ref, w1_ref, t1_ref, w2_ref, t2_ref, o_ref, xpad_ref):
    """Processes nb batch images per grid step.

    x_ref   : (nb, H, W, Cp)    f32  NHWC input (pre-relu), channels padded to Cp
    w1_ref  : (9*Cp, Cp)        bf16 3x3 conv weights (bn1 scale folded),
                                     rows ordered [(kh*3+kw)*Cp + cin]
    t1_ref  : (1, Cp)           f32  folded conv1 bias + bn1 shift
    w2_ref  : (Cp, Cp)          bf16 1x1 conv weights (bn2 scale folded)
    t2_ref  : (1, Cp)           f32  folded conv2 bias + bn2 shift
    o_ref   : (nb, H, W, Cp)
    xpad_ref: (nb, H+2, W+2, Cp) bf16 VMEM scratch (spatial halo for the 3x3 conv)
    """
    nb, H, W, Cp = x_ref.shape
    M = nb * H * W

    # Zero the halo scratch once; the interior is rewritten every grid step and
    # the 1-pixel border stays zero (== "same" padding of the 3x3 conv).
    @pl.when(pl.program_id(0) == 0)
    def _():
        xpad_ref[...] = jnp.zeros_like(xpad_ref)

    x = x_ref[...]                                              # (nb,H,W,Cp) f32
    xpad_ref[:, 1:H + 1, 1:W + 1, :] = jnp.maximum(x, 0.0).astype(xpad_ref.dtype)
    xp = xpad_ref[...]                                          # bf16, halo'd

    # im2col: one lane-dense (M, 9*Cp) patch matrix -> single K=9*Cp MXU matmul.
    patches = jnp.concatenate(
        [xp[:, kh:kh + H, kw:kw + W, :].reshape(M, Cp)
         for kh in range(3) for kw in range(3)], axis=-1)

    # conv1 + bias + bn1 (folded) + relu.
    h1 = jnp.maximum(
        jnp.dot(patches, w1_ref[...], preferred_element_type=jnp.float32)
        + t1_ref[...], 0.0)

    # conv2 (1x1) + bias + bn2 (folded).
    h2 = jnp.dot(h1.astype(jnp.bfloat16), w2_ref[...],
                 preferred_element_type=jnp.float32) + t2_ref[...]

    # Residual add with the original (pre-relu) input; lane-dense output store.
    o_ref[...] = (x.reshape(M, Cp) + h2).reshape(nb, H, W, Cp).astype(o_ref.dtype)


def _pick_batch_tile(N, H, W, Cp):
    """Largest batch tile dividing N that keeps the VMEM footprint modest."""
    per_img = (H * W * Cp * 4) * 2 * 2            # x + out blocks, double-buffered f32
    per_img += (H + 2) * (W + 2) * Cp * 2         # halo scratch (bf16)
    per_img += H * W * 9 * Cp * 2                 # im2col patches (bf16)
    per_img += H * W * Cp * 4 * 3                 # f32 temporaries (acc / h1 / h2)
    budget = 16 * 1024 * 1024                     # headroom vs v7x scoped VMEM
    nb = max(1, min(N, budget // per_img))
    while N % nb:
        nb -= 1
    return nb


@jax.jit
def resblock_pallas(x_nchw, params):
    """x_nchw: (N, C, H, W) float32.  Returns (N, C, H, W)."""
    w1, b1, g1, be1, m1, v1, w2, b2, g2, be2, m2, v2 = params
    eps = 1e-5
    lane = 128

    N, C, H, W = x_nchw.shape
    Cp = ((C + lane - 1) // lane) * lane
    nb = _pick_batch_tile(N, H, W, Cp)

    # NCHW -> NHWC, zero-pad channels to the lane width (single pad; spatial
    # halo padding happens inside the kernel, no extra HBM pass).
    x = jnp.transpose(x_nchw, (0, 2, 3, 1))
    x = jnp.pad(x, ((0, 0), (0, 0), (0, 0), (0, Cp - C)))

    # Fold eval-mode BN + conv biases into weights / per-channel shifts.
    s1 = g1 / jnp.sqrt(v1 + eps)
    t1 = (b1 - m1) * s1 + be1
    s2 = g2 / jnp.sqrt(v2 + eps)
    t2 = (b2 - m2) * s2 + be2

    # conv1: torch (out,in,3,3) -> rows [(kh*3+kw)*Cp + cin], cols cout; bn1
    # scale folded into output columns; bf16 operands for the MXU.
    w1_mm = jnp.transpose(w1, (2, 3, 1, 0)) * s1[None, None, None, :]
    w1_mm = jnp.pad(w1_mm, ((0, 0), (0, 0), (0, Cp - C), (0, Cp - C)))
    w1_mm = w1_mm.reshape(9 * Cp, Cp).astype(jnp.bfloat16)
    # conv2: (out,in,1,1) -> (in,out), bn2 scale folded into output columns.
    w2_mm = jnp.transpose(w2[:, :, 0, 0], (1, 0)) * s2[None, :]
    w2_mm = jnp.pad(w2_mm, ((0, Cp - C), (0, Cp - C))).astype(jnp.bfloat16)

    t1_p = jnp.pad(t1, (0, Cp - C)).reshape(1, Cp)
    t2_p = jnp.pad(t2, (0, Cp - C)).reshape(1, Cp)

    flops = 2 * N * H * W * (9 * Cp * Cp + Cp * Cp)
    bytes_accessed = (2 * N * H * W * Cp) * 4 + (9 * Cp * Cp + Cp * Cp) * 2 + 2 * Cp * 4

    full = lambda shape: pl.BlockSpec(shape, lambda n: (0,) * len(shape))

    out_nhwc = pl.pallas_call(
        resblock_kernel,
        out_shape=jax.ShapeDtypeStruct((N, H, W, Cp), x.dtype),
        grid=(N // nb,),
        in_specs=[
            pl.BlockSpec((nb, H, W, Cp), lambda n: (n, 0, 0, 0)),
            full((9 * Cp, Cp)),
            full((1, Cp)),
            full((Cp, Cp)),
            full((1, Cp)),
        ],
        out_specs=pl.BlockSpec((nb, H, W, Cp), lambda n: (n, 0, 0, 0)),
        scratch_shapes=[pltpu.VMEM((nb, H + 2, W + 2, Cp), jnp.bfloat16)],
        compiler_params=pltpu.CompilerParams(
            dimension_semantics=("parallel",),
            vmem_limit_bytes=32 * 1024 * 1024),
        cost_estimate=pl.CostEstimate(
            flops=flops, transcendentals=0, bytes_accessed=int(bytes_accessed)),
    )(x, w1_mm, t1_p, w2_mm, t2_p)

    # Drop channel padding, back to NCHW.
    return jnp.transpose(out_nhwc[..., :C], (0, 3, 1, 2))


def resblock_ref(x_nchw, params):
    """Pure-JAX f32 reference (NCHW, same semantics as the PyTorch module)."""
    w1, b1, g1, be1, m1, v1, w2, b2, g2, be2, m2, v2 = params
    eps = 1e-5

    def bn(y, g, b, m, v):
        return (y - m[None, :, None, None]) / jnp.sqrt(v[None, :, None, None] + eps) \
               * g[None, :, None, None] + b[None, :, None, None]

    x_skip = x_nchw
    x = jax.nn.relu(x_nchw)
    y = lax.conv_general_dilated(x, w1, window_strides=(1, 1), padding="SAME",
                                 dimension_numbers=("NCHW", "OIHW", "NCHW"))
    y = y + b1[None, :, None, None]
    y = jax.nn.relu(bn(y, g1, be1, m1, v1))
    z = lax.conv_general_dilated(y, w2, window_strides=(1, 1), padding="VALID",
                                 dimension_numbers=("NCHW", "OIHW", "NCHW"))
    z = z + b2[None, :, None, None]
    z = bn(z, g2, be2, m2, v2)
    return x_skip + z


def init_params(key, dim):
    ks = jax.random.split(key, 8)
    w1 = 0.1 * jax.random.normal(ks[0], (dim, dim, 3, 3), jnp.float32)
    b1 = 0.1 * jax.random.normal(ks[1], (dim,), jnp.float32)
    g1 = 1.0 + 0.1 * jax.random.normal(ks[2], (dim,), jnp.float32)
    be1 = 0.1 * jax.random.normal(ks[3], (dim,), jnp.float32)
    m1 = 0.05 * jax.random.normal(ks[4], (dim,), jnp.float32)
    v1 = 0.5 + jnp.abs(jax.random.normal(ks[5], (dim,), jnp.float32))
    w2 = 0.1 * jax.random.normal(ks[6], (dim, dim, 1, 1), jnp.float32)
    b2 = 0.1 * jax.random.normal(ks[7], (dim,), jnp.float32)
    g2 = jnp.ones((dim,), jnp.float32)
    be2 = jnp.zeros((dim,), jnp.float32)
    m2 = jnp.zeros((dim,), jnp.float32)
    v2 = jnp.ones((dim,), jnp.float32)
    return (w1, b1, g1, be1, m1, v1, w2, b2, g2, be2, m2, v2)


if __name__ == "__main__":
    key = jax.random.PRNGKey(0)
    kx, kp = jax.random.split(key)

    N, C, H, W = 2, 32, 8, 8                     # small, consistent with Conv2d(dim, dim)
    x = jax.random.normal(kx, (N, C, H, W), jnp.float32)
    params = init_params(kp, C)

    out = jax.block_until_ready(resblock_pallas(x, params))
    ref = resblock_ref(x, params)

    assert out.shape == (N, C, H, W)
    err = jnp.max(jnp.abs(out - ref))
    # bf16 matmul operands (f32 accumulation) => looser tolerance than pure f32.
    assert jnp.allclose(out, ref, atol=5e-2, rtol=5e-2), f"max abs err {err}"

    print("KERNEL_OK")
</pallas_src>

<mosaic_0001>
module attributes {stable_mosaic.version = 11 : i64} {
  func.func @resblock_kernel(%arg0: i32, %arg1: memref<2x8x8x128xf32, #tpu.memory_space<vmem>>, %arg2: memref<1152x128xbf16, #tpu.memory_space<vmem>>, %arg3: memref<1x128xf32, #tpu.memory_space<vmem>>, %arg4: memref<128x128xbf16, #tpu.memory_space<vmem>>, %arg5: memref<1x128xf32, #tpu.memory_space<vmem>>, %arg6: memref<2x8x8x128xf32, #tpu.memory_space<vmem>>, %arg7: memref<2x10x10x128xbf16, #tpu.memory_space<vmem>>) attributes {dimension_semantics = [#tpu.dimension_semantics<parallel>], iteration_bounds = array<i64: 1>, scalar_prefetch = 0 : i64, scratch_operands = 1 : i64, tpu.core_type = #tpu.core_type<tc>, window_params = [{transform_indices = @transform_0, window_bounds = array<i64: 2, 8, 8, 128>}, {pipeline_mode = #tpu.pipeline_mode<synchronous>, transform_indices = @transform_1, window_bounds = array<i64: 1152, 128>}, {pipeline_mode = #tpu.pipeline_mode<synchronous>, transform_indices = @transform_2, window_bounds = array<i64: 1, 128>}, {pipeline_mode = #tpu.pipeline_mode<synchronous>, transform_indices = @transform_3, window_bounds = array<i64: 128, 128>}, {pipeline_mode = #tpu.pipeline_mode<synchronous>, transform_indices = @transform_4, window_bounds = array<i64: 1, 128>}, {transform_indices = @transform_5, window_bounds = array<i64: 2, 8, 8, 128>}]} {
    %c0_i32 = arith.constant 0 : i32
    %0 = arith.cmpi eq, %arg0, %c0_i32 : i32
    %1 = arith.extui %0 : i1 to i32
    %c0_i32_0 = arith.constant 0 : i32
    %2 = arith.cmpi ne, %1, %c0_i32_0 : i32
    scf.if %2 {
      %cst_26 = arith.constant 0.000000e+00 : bf16
      %45 = vector.broadcast %cst_26 : bf16 to vector<2x10x10x128xbf16>
      %c0_27 = arith.constant 0 : index
      %c0_28 = arith.constant 0 : index
      %c0_29 = arith.constant 0 : index
      %c0_30 = arith.constant 0 : index
      %46 = vector.load %arg7[%c0_27, %c0_28, %c0_29, %c0_30] : memref<2x10x10x128xbf16, #tpu.memory_space<vmem>>, vector<2x10x10x128xbf16>
      tpu.vector_store %arg7[%c0_27, %c0_28, %c0_29, %c0_30], %45 {strides = array<i32>} : memref<2x10x10x128xbf16, #tpu.memory_space<vmem>>, vector<2x10x10x128xbf16>,
    } else {
    }
    %c0 = arith.constant 0 : index
    %c0_1 = arith.constant 0 : index
    %c0_2 = arith.constant 0 : index
    %c0_3 = arith.constant 0 : index
    %3 = vector.load %arg1[%c0, %c0_1, %c0_2, %c0_3] : memref<2x8x8x128xf32, #tpu.memory_space<vmem>>, vector<2x8x8x128xf32>
    %cst = arith.constant 0.000000e+00 : f32
    %4 = vector.broadcast %cst : f32 to vector<2x8x8x128xf32>
    %5 = arith.maximumf %3, %4 : vector<2x8x8x128xf32>
    %6 = arith.truncf %5 : vector<2x8x8x128xf32> to vector<2x8x8x128xbf16>
    %c0_4 = arith.constant 0 : index
    %c1 = arith.constant 1 : index
    %c1_5 = arith.constant 1 : index
    %c0_6 = arith.constant 0 : index
    %7 = vector.load %arg7[%c0_4, %c1, %c1_5, %c0_6] : memref<2x10x10x128xbf16, #tpu.memory_space<vmem>>, vector<2x8x8x128xbf16>
    tpu.vector_store %arg7[%c0_4, %c1, %c1_5, %c0_6], %6 {strides = array<i32>} : memref<2x10x10x128xbf16, #tpu.memory_space<vmem>>, vector<2x8x8x128xbf16>,
    %c0_7 = arith.constant 0 : index
    %c0_8 = arith.constant 0 : index
    %c0_9 = arith.constant 0 : index
    %c0_10 = arith.constant 0 : index
    %8 = vector.load %arg7[%c0_7, %c0_8, %c0_9, %c0_10] : memref<2x10x10x128xbf16, #tpu.memory_space<vmem>>, vector<2x10x10x128xbf16>
    %9 = vector.extract_strided_slice %8 {offsets = [0, 0, 0, 0], sizes = [2, 8, 8, 128], strides = [1, 1, 1, 1]} : vector<2x10x10x128xbf16> to vector<2x8x8x128xbf16>
    %10 = vector.shape_cast %9 : vector<2x8x8x128xbf16> to vector<128x128xbf16>
    %11 = vector.extract_strided_slice %8 {offsets = [0, 0, 1, 0], sizes = [2, 8, 8, 128], strides = [1, 1, 1, 1]} : vector<2x10x10x128xbf16> to vector<2x8x8x128xbf16>
    %12 = vector.shape_cast %11 : vector<2x8x8x128xbf16> to vector<128x128xbf16>
    %13 = vector.extract_strided_slice %8 {offsets = [0, 0, 2, 0], sizes = [2, 8, 8, 128], strides = [1, 1, 1, 1]} : vector<2x10x10x128xbf16> to vector<2x8x8x128xbf16>
    %14 = vector.shape_cast %13 : vector<2x8x8x128xbf16> to vector<128x128xbf16>
    %15 = vector.extract_strided_slice %8 {offsets = [0, 1, 0, 0], sizes = [2, 8, 8, 128], strides = [1, 1, 1, 1]} : vector<2x10x10x128xbf16> to vector<2x8x8x128xbf16>
    %16 = vector.shape_cast %15 : vector<2x8x8x128xbf16> to vector<128x128xbf16>
    %17 = vector.extract_strided_slice %8 {offsets = [0, 1, 1, 0], sizes = [2, 8, 8, 128], strides = [1, 1, 1, 1]} : vector<2x10x10x128xbf16> to vector<2x8x8x128xbf16>
    %18 = vector.shape_cast %17 : vector<2x8x8x128xbf16> to vector<128x128xbf16>
    %19 = vector.extract_strided_slice %8 {offsets = [0, 1, 2, 0], sizes = [2, 8, 8, 128], strides = [1, 1, 1, 1]} : vector<2x10x10x128xbf16> to vector<2x8x8x128xbf16>
    %20 = vector.shape_cast %19 : vector<2x8x8x128xbf16> to vector<128x128xbf16>
    %21 = vector.extract_strided_slice %8 {offsets = [0, 2, 0, 0], sizes = [2, 8, 8, 128], strides = [1, 1, 1, 1]} : vector<2x10x10x128xbf16> to vector<2x8x8x128xbf16>
    %22 = vector.shape_cast %21 : vector<2x8x8x128xbf16> to vector<128x128xbf16>
    %23 = vector.extract_strided_slice %8 {offsets = [0, 2, 1, 0], sizes = [2, 8, 8, 128], strides = [1, 1, 1, 1]} : vector<2x10x10x128xbf16> to vector<2x8x8x128xbf16>
    %24 = vector.shape_cast %23 : vector<2x8x8x128xbf16> to vector<128x128xbf16>
    %25 = vector.extract_strided_slice %8 {offsets = [0, 2, 2, 0], sizes = [2, 8, 8, 128], strides = [1, 1, 1, 1]} : vector<2x10x10x128xbf16> to vector<2x8x8x128xbf16>
    %26 = vector.shape_cast %25 : vector<2x8x8x128xbf16> to vector<128x128xbf16>
    %27 = tpu.concatenate %10, %12, %14, %16, %18, %20, %22, %24, %26 in 1 : vector<128x128xbf16>, vector<128x128xbf16>, vector<128x128xbf16>, vector<128x128xbf16>, vector<128x128xbf16>, vector<128x128xbf16>, vector<128x128xbf16>, vector<128x128xbf16>, vector<128x128xbf16> -> vector<128x1152xbf16>
    %c0_11 = arith.constant 0 : index
    %c0_12 = arith.constant 0 : index
    %28 = vector.load %arg2[%c0_11, %c0_12] : memref<1152x128xbf16, #tpu.memory_space<vmem>>, vector<1152x128xbf16>
    %cst_13 = arith.constant dense<0.000000e+00> : vector<128x128xf32>
    %29 = tpu.matmul %27, %28, %cst_13 {dimension_numbers = #tpu.dot_dimension_numbers<[1], [0], [0], [1], [0, 0, 1, 1], [], []>} : vector<128x1152xbf16>, vector<1152x128xbf16>, vector<128x128xf32> -> vector<128x128xf32>
    %c0_14 = arith.constant 0 : index
    %c0_15 = arith.constant 0 : index
    %30 = vector.load %arg3[%c0_14, %c0_15] : memref<1x128xf32, #tpu.memory_space<vmem>>, vector<1x128xf32>
    %31 = vector.broadcast %30 : vector<1x128xf32> to vector<128x128xf32>
    %32 = arith.addf %29, %31 : vector<128x128xf32>
    %cst_16 = arith.constant 0.000000e+00 : f32
    %33 = vector.broadcast %cst_16 : f32 to vector<128x128xf32>
    %34 = arith.maximumf %32, %33 : vector<128x128xf32>
    %35 = arith.truncf %34 : vector<128x128xf32> to vector<128x128xbf16>
    %c0_17 = arith.constant 0 : index
    %c0_18 = arith.constant 0 : index
    %36 = vector.load %arg4[%c0_17, %c0_18] : memref<128x128xbf16, #tpu.memory_space<vmem>>, vector<128x128xbf16>
    %cst_19 = arith.constant dense<0.000000e+00> : vector<128x128xf32>
    %37 = tpu.matmul %35, %36, %cst_19 {dimension_numbers = #tpu.dot_dimension_numbers<[1], [0], [0], [1], [0, 0, 1, 1], [], []>} : vector<128x128xbf16>, vector<128x128xbf16>, vector<128x128xf32> -> vector<128x128xf32>
    %c0_20 = arith.constant 0 : index
    %c0_21 = arith.constant 0 : index
    %38 = vector.load %arg5[%c0_20, %c0_21] : memref<1x128xf32, #tpu.memory_space<vmem>>, vector<1x128xf32>
    %39 = vector.broadcast %38 : vector<1x128xf32> to vector<128x128xf32>
    %40 = arith.addf %37, %39 : vector<128x128xf32>
    %41 = vector.shape_cast %3 : vector<2x8x8x128xf32> to vector<128x128xf32>
    %42 = arith.addf %41, %40 : vector<128x128xf32>
    %43 = vector.shape_cast %42 : vector<128x128xf32> to vector<2x8x8x128xf32>
    %c0_22 = arith.constant 0 : index
    %c0_23 = arith.constant 0 : index
    %c0_24 = arith.constant 0 : index
    %c0_25 = arith.constant 0 : index
    %44 = vector.load %arg6[%c0_22, %c0_23, %c0_24, %c0_25] : memref<2x8x8x128xf32, #tpu.memory_space<vmem>>, vector<2x8x8x128xf32>
    tpu.vector_store %arg6[%c0_22, %c0_23, %c0_24, %c0_25], %43 {strides = array<i32>} : memref<2x8x8x128xf32, #tpu.memory_space<vmem>>, vector<2x8x8x128xf32>,
    return
  }
  func.func @transform_0(%arg0: i32) -> (i32, i32, i32, i32) {
    %c0_i32 = arith.constant 0 : i32
    %c0_i32_0 = arith.constant 0 : i32
    %c0_i32_1 = arith.constant 0 : i32
    %c0_i32_2 = arith.constant 0 : i32
    return %arg0, %c0_i32, %c0_i32_0, %c0_i32_1 : i32, i32, i32, i32
  }
  func.func @transform_1(%arg0: i32) -> (i32, i32) {
    %c0_i32 = arith.constant 0 : i32
    %c0_i32_0 = arith.constant 0 : i32
    %c0_i32_1 = arith.constant 0 : i32
    return %c0_i32, %c0_i32_0 : i32, i32
  }
  func.func @transform_2(%arg0: i32) -> (i32, i32) {
    %c0_i32 = arith.constant 0 : i32
    %c0_i32_0 = arith.constant 0 : i32
    %c0_i32_1 = arith.constant 0 : i32
    return %c0_i32, %c0_i32_0 : i32, i32
  }
  func.func @transform_3(%arg0: i32) -> (i32, i32) {
    %c0_i32 = arith.constant 0 : i32
    %c0_i32_0 = arith.constant 0 : i32
    %c0_i32_1 = arith.constant 0 : i32
    return %c0_i32, %c0_i32_0 : i32, i32
  }
  func.func @transform_4(%arg0: i32) -> (i32, i32) {
    %c0_i32 = arith.constant 0 : i32
    %c0_i32_0 = arith.constant 0 : i32
    %c0_i32_1 = arith.constant 0 : i32
    return %c0_i32, %c0_i32_0 : i32, i32
  }
  func.func @transform_5(%arg0: i32) -> (i32, i32, i32, i32) {
    %c0_i32 = arith.constant 0 : i32
    %c0_i32_0 = arith.constant 0 : i32
    %c0_i32_1 = arith.constant 0 : i32
    %c0_i32_2 = arith.constant 0 : i32
    return %arg0, %c0_i32, %c0_i32_0, %c0_i32_1 : i32, i32, i32, i32
  }
}

</mosaic_0001>

<llo_original>
// kernel: resblock_pallas.1
$region0: #{resblock_pallas.1}
  #allocation0 [shape = 'u32[]', space=smem, size = 0x4, offset = 0x4, fixed_abs, tag = 'smem constant byte address 0x4 - core index']
  #allocation1 [shape = 'u32[144,128]{1,0:T(1,128)}', space=vmem, size = 0x12000, scoped, tag = 'internal scratch']
  #allocation2 [shape = 'bf16[2,10,10,128]{3,2,1,0:T(8,128)(2,1)}', space=vmem, size = 0x14000, scoped, tag = 'scratch operand']
  %s0 = inlined_call_operand.vmem [shape: f32[2,8,8,128], index: 0, kind: input, shape index: {}]
  %s1 = inlined_call_operand.vmem [shape: bf16[1152,128], index: 1, kind: input, shape index: {}]
  %s2 = inlined_call_operand.vmem [shape: f32[1,128], index: 2, kind: input, shape index: {}]
  %s3 = inlined_call_operand.vmem [shape: bf16[128,128], index: 3, kind: input, shape index: {}]
  %s4 = inlined_call_operand.vmem [shape: f32[1,128], index: 4, kind: input, shape index: {}]
  %s5 = inlined_call_operand.vmem [shape: f32[2,8,8,128], index: 5, kind: output, shape index: {}]
  %s6 = sld [smem:[#allocation0]]
  $region34: #{resblock_pallas.1} parent=0
    _
  %s8 = ssub.s32 1, %s6
  %s9 = scalar_select 0, %s8, %s6
  // Predicated region
  $region2: #{resblock_pallas.1} parent=0 // pred_check
    _
  $region3: #{resblock_pallas.1} parent=0 // pred_check_branch
    %11 = sbr.rel (0) target = $region5
  $region4: #{resblock_pallas.1} parent=0 // pred_region
    _
  $region5: #{resblock_pallas.1} parent=0 // pred_fallthru
    _
  // Predicated region
  $region6: #{resblock_pallas.1} parent=0 // pred_check
    _
  $region7: #{resblock_pallas.1} parent=0 // pred_check_branch
    %13 = sbr.rel (0) target = $region9
  $region8: #{resblock_pallas.1} parent=0 // pred_region
    _
  $region9: #{resblock_pallas.1} parent=0 // pred_fallthru
    _
  // Predicated region
  $region10: #{resblock_pallas.1} parent=0 // pred_check
    _
  $region11: #{resblock_pallas.1} parent=0 // pred_check_branch
    %15 = sbr.rel (0) target = $region13
  $region12: #{resblock_pallas.1} parent=0 // pred_region
    _
  $region13: #{resblock_pallas.1} parent=0 // pred_fallthru
    _
  // Predicated region
  $region14: #{resblock_pallas.1} parent=0 // pred_check
    _
  $region15: #{resblock_pallas.1} parent=0 // pred_check_branch
    %17 = sbr.rel (0) target = $region17
  $region16: #{resblock_pallas.1} parent=0 // pred_region
    _
  $region17: #{resblock_pallas.1} parent=0 // pred_fallthru
    _
  // Predicated region
  $region18: #{resblock_pallas.1} parent=0 // pred_check
    _
  $region19: #{resblock_pallas.1} parent=0 // pred_check_branch
    %19 = sbr.rel (0) target = $region21
  $region20: #{resblock_pallas.1} parent=0 // pred_region
    _
  $region21: #{resblock_pallas.1} parent=0 // pred_fallthru
    _
  %p21 = scmp.eq.s32.totalorder 0, 0
  // Predicated region
  $region22: #{resblock_pallas.1} parent=0 // pred_check
    %p22 = pneg %p21
  $region23: #{resblock_pallas.1} parent=0 // pred_check_branch
    %24 = sbr.rel (%p22) target = $region25
  $region24: #{resblock_pallas.1} parent=0 // pred_region
    %25 = vst [vmem:[#allocation2] sm:$0xf] 0
    %26 = vst [vmem:[#allocation2 + $0x4] sm:$0x1] 0
    %27 = vst [vmem:[#allocation2 + $0x8] sm:$0xf] 0
    %28 = vst [vmem:[#allocation2 + $0xc] sm:$0x1] 0
    %29 = vst [vmem:[#allocation2 + $0x10] sm:$0xf] 0
    %30 = vst [vmem:[#allocation2 + $0x14] sm:$0x1] 0
    %31 = vst [vmem:[#allocation2 + $0x18] sm:$0xf] 0
    %32 = vst [vmem:[#allocation2 + $0x1c] sm:$0x1] 0
    %33 = vst [vmem:[#allocation2 + $0x20] sm:$0xf] 0
    %34 = vst [vmem:[#allocation2 + $0x24] sm:$0x1] 0
    %35 = vst [vmem:[#allocation2 + $0x28] sm:$0xf] 0
    %36 = vst [vmem:[#allocation2 + $0x2c] sm:$0x1] 0
    %37 = vst [vmem:[#allocation2 + $0x30] sm:$0xf] 0
    %38 = vst [vmem:[#allocation2 + $0x34] sm:$0x1] 0
    %39 = vst [vmem:[#allocation2 + $0x38] sm:$0xf] 0
    %40 = vst [vmem:[#allocation2 + $0x3c] sm:$0x1] 0
    %41 = vst [vmem:[#allocation2 + $0x40] sm:$0xf] 0
    %42 = vst [vmem:[#allocation2 + $0x44] sm:$0x1] 0
    %43 = vst [vmem:[#allocation2 + $0x48] sm:$0xf] 0
    %44 = vst [vmem:[#allocation2 + $0x4c] sm:$0x1] 0
    %45 = vst [vmem:[#allocation2 + $0x50] sm:$0xf] 0
    %46 = vst [vmem:[#allocation2 + $0x54] sm:$0x1] 0
    %47 = vst [vmem:[#allocation2 + $0x58] sm:$0xf] 0
    %48 = vst [vmem:[#allocation2 + $0x5c] sm:$0x1] 0
    %49 = vst [vmem:[#allocation2 + $0x60] sm:$0xf] 0
    %50 = vst [vmem:[#allocation2 + $0x64] sm:$0x1] 0
    %51 = vst [vmem:[#allocation2 + $0x68] sm:$0xf] 0
    %52 = vst [vmem:[#allocation2 + $0x6c] sm:$0x1] 0
    %53 = vst [vmem:[#allocation2 + $0x70] sm:$0xf] 0
    %54 = vst [vmem:[#allocation2 + $0x74] sm:$0x1] 0
    %55 = vst [vmem:[#allocation2 + $0x78] sm:$0xf] 0
    %56 = vst [vmem:[#allocation2 + $0x7c] sm:$0x1] 0
    %57 = vst [vmem:[#allocation2 + $0x80] sm:$0xf] 0
    %58 = vst [vmem:[#allocation2 + $0x84] sm:$0x1] 0
    %59 = vst [vmem:[#allocation2 + $0x88] sm:$0xf] 0
    %60 = vst [vmem:[#allocation2 + $0x8c] sm:$0x1] 0
    %61 = vst [vmem:[#allocation2 + $0x90] sm:$0xf] 0
    %62 = vst [vmem:[#allocation2 + $0x94] sm:$0x1] 0
    %63 = vst [vmem:[#allocation2 + $0x98] sm:$0xf] 0
    %64 = vst [vmem:[#allocation2 + $0x9c] sm:$0x1] 0
  $region25: #{resblock_pallas.1} parent=0 // pred_fallthru
    _
  %v65 = vld [vmem:[%s0] sm:$0xff]
  %v66 = vld [vmem:[%s0 + $0x8] sm:$0xff]
  %v67 = vld [vmem:[%s0 + $0x10] sm:$0xff]
  %v68 = vld [vmem:[%s0 + $0x18] sm:$0xff]
  %v69 = vld [vmem:[%s0 + $0x20] sm:$0xff]
  %v70 = vld [vmem:[%s0 + $0x28] sm:$0xff]
  %v71 = vld [vmem:[%s0 + $0x30] sm:$0xff]
  %v72 = vld [vmem:[%s0 + $0x38] sm:$0xff]
  %v73 = vld [vmem:[%s0 + $0x40] sm:$0xff]
  %v74 = vld [vmem:[%s0 + $0x48] sm:$0xff]
  %v75 = vld [vmem:[%s0 + $0x50] sm:$0xff]
  %v76 = vld [vmem:[%s0 + $0x58] sm:$0xff]
  %v77 = vld [vmem:[%s0 + $0x60] sm:$0xff]
  %v78 = vld [vmem:[%s0 + $0x68] sm:$0xff]
  %v79 = vld [vmem:[%s0 + $0x70] sm:$0xff]
  %v80 = vld [vmem:[%s0 + $0x78] sm:$0xff]
  %v81 = vmax.f32 %v65, 0.0
  %v82 = vmax.f32 %v66, 0.0
  %v83 = vmax.f32 %v67, 0.0
  %v84 = vmax.f32 %v68, 0.0
  %v85 = vmax.f32 %v69, 0.0
  %v86 = vmax.f32 %v70, 0.0
  %v87 = vmax.f32 %v71, 0.0
  %v88 = vmax.f32 %v72, 0.0
  %v89 = vmax.f32 %v73, 0.0
  %v90 = vmax.f32 %v74, 0.0
  %v91 = vmax.f32 %v75, 0.0
  %v92 = vmax.f32 %v76, 0.0
  %v93 = vmax.f32 %v77, 0.0
  %v94 = vmax.f32 %v78, 0.0
  %v95 = vmax.f32 %v79, 0.0
  %v96 = vmax.f32 %v80, 0.0
  %v97 = vpack.c.bf16 %v81, %v81
  %v98 = vpack.c.bf16 %v82, %v82
  %v99 = vpack.c.bf16 %v83, %v83
  %v100 = vpack.c.bf16 %v84, %v84
  %v101 = vpack.c.bf16 %v85, %v85
  %v102 = vpack.c.bf16 %v86, %v86
  %v103 = vpack.c.bf16 %v87, %v87
  %v104 = vpack.c.bf16 %v88, %v88
  %v105 = vpack.c.bf16 %v89, %v89
  %v106 = vpack.c.bf16 %v90, %v90
  %v107 = vpack.c.bf16 %v91, %v91
  %v108 = vpack.c.bf16 %v92, %v92
  %v109 = vpack.c.bf16 %v93, %v93
  %v110 = vpack.c.bf16 %v94, %v94
  %v111 = vpack.c.bf16 %v95, %v95
  %v112 = vpack.c.bf16 %v96, %v96
  %v129 = vunpack.c.l.b16 %v97
  %v130 = vunpack.c.l.b16 %v98
  %v131 = vunpack.c.l.b16 %v99
  %v132 = vunpack.c.l.b16 %v100
  %v133 = vunpack.c.l.b16 %v101
  %v134 = vunpack.c.l.b16 %v102
  %v135 = vunpack.c.l.b16 %v103
  %v136 = vunpack.c.l.b16 %v104
  %v137 = vunpack.c.l.b16 %v105
  %v138 = vunpack.c.l.b16 %v106
  %v139 = vunpack.c.l.b16 %v107
  %v140 = vunpack.c.l.b16 %v108
  %v141 = vunpack.c.l.b16 %v109
  %v142 = vunpack.c.l.b16 %v110
  %v143 = vunpack.c.l.b16 %v111
  %v144 = vunpack.c.l.b16 %v112
  %v145 = vpack.c.b16 %v129, %v129
  %v146 = vpack.c.b16 %v130, %v130
  %v147 = vpack.c.b16 %v131, %v131
  %v148 = vpack.c.b16 %v132, %v132
  %v149 = vpack.c.b16 %v133, %v133
  %v150 = vpack.c.b16 %v134, %v134
  %v151 = vpack.c.b16 %v135, %v135
  %v152 = vpack.c.b16 %v136, %v136
  %v153 = vpack.c.b16 %v137, %v137
  %v154 = vpack.c.b16 %v138, %v138
  %v155 = vpack.c.b16 %v139, %v139
  %v156 = vpack.c.b16 %v140, %v140
  %v157 = vpack.c.b16 %v141, %v141
  %v158 = vpack.c.b16 %v142, %v142
  %v159 = vpack.c.b16 %v143, %v143
  %v160 = vpack.c.b16 %v144, %v144
  %v162 = vshrl.u32 %v145, 16
  %v164 = vrot.slane %v162, 7
  %v165 = vshll.u32 %v145, 16
  %v167 = vor.u32 %v164, %v165
  %v168 = vrot.slane %v164, 4
  %v170 = vshrl.u32 %v146, 16
  %v172 = vrot.slane %v170, 7
  %v173 = vshll.u32 %v146, 16
  %v175 = vor.u32 %v172, %v173
  %v176 = vrot.slane %v172, 4
  %v178 = vshrl.u32 %v147, 16
  %v180 = vrot.slane %v178, 7
  %v181 = vshll.u32 %v147, 16
  %v183 = vor.u32 %v180, %v181
  %v184 = vrot.slane %v180, 4
  %v186 = vshrl.u32 %v148, 16
  %v188 = vrot.slane %v186, 7
  %v189 = vshll.u32 %v148, 16
  %v191 = vor.u32 %v188, %v189
  %v192 = vrot.slane %v188, 4
  %v194 = vshrl.u32 %v149, 16
  %v196 = vrot.slane %v194, 7
  %v197 = vshll.u32 %v149, 16
  %v199 = vor.u32 %v196, %v197
  %v200 = vrot.slane %v196, 4
  %v202 = vshrl.u32 %v150, 16
  %v204 = vrot.slane %v202, 7
  %v205 = vshll.u32 %v150, 16
  %v207 = vor.u32 %v204, %v205
  %v208 = vrot.slane %v204, 4
  %v210 = vshrl.u32 %v151, 16
  %v212 = vrot.slane %v210, 7
  %v213 = vshll.u32 %v151, 16
  %v215 = vor.u32 %v212, %v213
  %v216 = vrot.slane %v212, 4
  %v218 = vshrl.u32 %v152, 16
  %v220 = vrot.slane %v218, 7
  %v221 = vshll.u32 %v152, 16
  %v223 = vor.u32 %v220, %v221
  %v224 = vrot.slane %v220, 4
  %v226 = vshrl.u32 %v153, 16
  %v228 = vrot.slane %v226, 7
  %v229 = vshll.u32 %v153, 16
  %v231 = vor.u32 %v228, %v229
  %v232 = vrot.slane %v228, 4
  %v234 = vshrl.u32 %v154, 16
  %v236 = vrot.slane %v234, 7
  %v237 = vshll.u32 %v154, 16
  %v239 = vor.u32 %v236, %v237
  %v240 = vrot.slane %v236, 4
  %v242 = vshrl.u32 %v155, 16
  %v244 = vrot.slane %v242, 7
  %v245 = vshll.u32 %v155, 16
  %v247 = vor.u32 %v244, %v245
  %v248 = vrot.slane %v244, 4
  %v250 = vshrl.u32 %v156, 16
  %v252 = vrot.slane %v250, 7
  %v253 = vshll.u32 %v156, 16
  %v255 = vor.u32 %v252, %v253
  %v256 = vrot.slane %v252, 4
  %v258 = vshrl.u32 %v157, 16
  %v260 = vrot.slane %v258, 7
  %v261 = vshll.u32 %v157, 16
  %v263 = vor.u32 %v260, %v261
  %v264 = vrot.slane %v260, 4
  %v266 = vshrl.u32 %v158, 16
  %v268 = vrot.slane %v266, 7
  %v269 = vshll.u32 %v158, 16
  %v271 = vor.u32 %v268, %v269
  %v272 = vrot.slane %v268, 4
  %v274 = vshrl.u32 %v159, 16
  %v276 = vrot.slane %v274, 7
  %v277 = vshll.u32 %v159, 16
  %v279 = vor.u32 %v276, %v277
  %v280 = vrot.slane %v276, 4
  %v282 = vshrl.u32 %v160, 16
  %v284 = vrot.slane %v282, 7
  %v285 = vshll.u32 %v160, 16
  %v287 = vor.u32 %v284, %v285
  %v288 = vrot.slane %v284, 4
  %s321 = scalar_lea.vmem [#allocation2], 8
  %vm322 = vcmask 1043456
  %vm323 = vsmask.f32 7938
  %vm324 = vmand %vm322, %vm323
  %v325 = vld [vmem:[%s321] sm:$0xf]
  %v326 = vsel %vm324, %v167, %v325
  %327 = vst [vmem:[%s321] sm:$0xf] %v326
  %vm328 = vcmask 1040384
  %vm329 = vsmask.f32 256
  %vm330 = vmand %vm328, %vm329
  %v331 = vld [vmem:[%s321 + $0x4] sm:$0x1]
  %v332 = vsel %vm330, %v168, %v331
  %333 = vst [vmem:[%s321 + $0x4] sm:$0x1] %v332
  %v334 = vld [vmem:[%s321 + $0x8] sm:$0xf]
  %v335 = vsel %vm324, %v175, %v334
  %336 = vst [vmem:[%s321 + $0x8] sm:$0xf] %v335
  %v337 = vld [vmem:[%s321 + $0xc] sm:$0x1]
  %v338 = vsel %vm330, %v176, %v337
  %339 = vst [vmem:[%s321 + $0xc] sm:$0x1] %v338
  %v340 = vld [vmem:[%s321 + $0x10] sm:$0xf]
  %v341 = vsel %vm324, %v183, %v340
  %342 = vst [vmem:[%s321 + $0x10] sm:$0xf] %v341
  %v343 = vld [vmem:[%s321 + $0x14] sm:$0x1]
  %v344 = vsel %vm330, %v184, %v343
  %345 = vst [vmem:[%s321 + $0x14] sm:$0x1] %v344
  %v346 = vld [vmem:[%s321 + $0x18] sm:$0xf]
  %v347 = vsel %vm324, %v191, %v346
  %348 = vst [vmem:[%s321 + $0x18] sm:$0xf] %v347
  %v349 = vld [vmem:[%s321 + $0x1c] sm:$0x1]
  %v350 = vsel %vm330, %v192, %v349
  %351 = vst [vmem:[%s321 + $0x1c] sm:$0x1] %v350
  %v352 = vld [vmem:[%s321 + $0x20] sm:$0xf]
  %v353 = vsel %vm324, %v199, %v352
  %354 = vst [vmem:[%s321 + $0x20] sm:$0xf] %v353
  %v355 = vld [vmem:[%s321 + $0x24] sm:$0x1]
  %v356 = vsel %vm330, %v200, %v355
  %357 = vst [vmem:[%s321 + $0x24] sm:$0x1] %v356
  %v358 = vld [vmem:[%s321 + $0x28] sm:$0xf]
  %v359 = vsel %vm324, %v207, %v358
  %360 = vst [vmem:[%s321 + $0x28] sm:$0xf] %v359
  %v361 = vld [vmem:[%s321 + $0x2c] sm:$0x1]
  %v362 = vsel %vm330, %v208, %v361
  %363 = vst [vmem:[%s321 + $0x2c] sm:$0x1] %v362
  %v364 = vld [vmem:[%s321 + $0x30] sm:$0xf]
  %v365 = vsel %vm324, %v215, %v364
  %366 = vst [vmem:[%s321 + $0x30] sm:$0xf] %v365
  %v367 = vld [vmem:[%s321 + $0x34] sm:$0x1]
  %v368 = vsel %vm330, %v216, %v367
  %369 = vst [vmem:[%s321 + $0x34] sm:$0x1] %v368
  %v370 = vld [vmem:[%s321 + $0x38] sm:$0xf]
  %v371 = vsel %vm324, %v223, %v370
  %372 = vst [vmem:[%s321 + $0x38] sm:$0xf] %v371
  %v373 = vld [vmem:[%s321 + $0x3c] sm:$0x1]
  %v374 = vsel %vm330, %v224, %v373
  %375 = vst [vmem:[%s321 + $0x3c] sm:$0x1] %v374
  %v376 = vld [vmem:[%s321 + $0x50] sm:$0xf]
  %v377 = vsel %vm324, %v231, %v376
  %378 = vst [vmem:[%s321 + $0x50] sm:$0xf] %v377
  %v379 = vld [vmem:[%s321 + $0x54] sm:$0x1]
  %v380 = vsel %vm330, %v232, %v379
  %381 = vst [vmem:[%s321 + $0x54] sm:$0x1] %v380
  %v382 = vld [vmem:[%s321 + $0x58] sm:$0xf]
  %v383 = vsel %vm324, %v239, %v382
  %384 = vst [vmem:[%s321 + $0x58] sm:$0xf] %v383
  %v385 = vld [vmem:[%s321 + $0x5c] sm:$0x1]
  %v386 = vsel %vm330, %v240, %v385
  %387 = vst [vmem:[%s321 + $0x5c] sm:$0x1] %v386
  %v388 = vld [vmem:[%s321 + $0x60] sm:$0xf]
  %v389 = vsel %vm324, %v247, %v388
  %390 = vst [vmem:[%s321 + $0x60] sm:$0xf] %v389
  %v391 = vld [vmem:[%s321 + $0x64] sm:$0x1]
  %v392 = vsel %vm330, %v248, %v391
  %393 = vst [vmem:[%s321 + $0x64] sm:$0x1] %v392
  %v394 = vld [vmem:[%s321 + $0x68] sm:$0xf]
  %v395 = vsel %vm324, %v255, %v394
  %396 = vst [vmem:[%s321 + $0x68] sm:$0xf] %v395
  %v397 = vld [vmem:[%s321 + $0x6c] sm:$0x1]
  %v398 = vsel %vm330, %v256, %v397
  %399 = vst [vmem:[%s321 + $0x6c] sm:$0x1] %v398
  %v400 = vld [vmem:[%s321 + $0x70] sm:$0xf]
  %v401 = vsel %vm324, %v263, %v400
  %402 = vst [vmem:[%s321 + $0x70] sm:$0xf] %v401
  %v403 = vld [vmem:[%s321 + $0x74] sm:$0x1]
  %v404 = vsel %vm330, %v264, %v403
  %405 = vst [vmem:[%s321 + $0x74] sm:$0x1] %v404
  %v406 = vld [vmem:[%s321 + $0x78] sm:$0xf]
  %v407 = vsel %vm324, %v271, %v406
  %408 = vst [vmem:[%s321 + $0x78] sm:$0xf] %v407
  %v409 = vld [vmem:[%s321 + $0x7c] sm:$0x1]
  %v410 = vsel %vm330, %v272, %v409
  %411 = vst [vmem:[%s321 + $0x7c] sm:$0x1] %v410
  %v412 = vld [vmem:[%s321 + $0x80] sm:$0xf]
  %v413 = vsel %vm324, %v279, %v412
  %414 = vst [vmem:[%s321 + $0x80] sm:$0xf] %v413
  %v415 = vld [vmem:[%s321 + $0x84] sm:$0x1]
  %v416 = vsel %vm330, %v280, %v415
  %417 = vst [vmem:[%s321 + $0x84] sm:$0x1] %v416
  %v418 = vld [vmem:[%s321 + $0x88] sm:$0xf]
  %v419 = vsel %vm324, %v287, %v418
  %420 = vst [vmem:[%s321 + $0x88] sm:$0xf] %v419
  %v421 = vld [vmem:[%s321 + $0x8c] sm:$0x1]
  %v422 = vsel %vm330, %v288, %v421
  %423 = vst [vmem:[%s321 + $0x8c] sm:$0x1] %v422
  %v424 = vld [vmem:[#allocation2] sm:$0xf]
  %v425 = vld [vmem:[#allocation2 + $0x4] sm:$0x1]
  %v426 = vld [vmem:[#allocation2 + $0x8] sm:$0xf]
  %v427 = vld [vmem:[#allocation2 + $0xc] sm:$0x1]
  %v428 = vld [vmem:[#allocation2 + $0x10] sm:$0xf]
  %v429 = vld [vmem:[#allocation2 + $0x14] sm:$0x1]
  %v430 = vld [vmem:[#allocation2 + $0x18] sm:$0xf]
  %v431 = vld [vmem:[#allocation2 + $0x1c] sm:$0x1]
  %v432 = vld [vmem:[#allocation2 + $0x20] sm:$0xf]
  %v433 = vld [vmem:[#allocation2 + $0x24] sm:$0x1]
  %v434 = vld [vmem:[#allocation2 + $0x28] sm:$0xf]
  %v435 = vld [vmem:[#allocation2 + $0x2c] sm:$0x1]
  %v436 = vld [vmem:[#allocation2 + $0x30] sm:$0xf]
  %v437 = vld [vmem:[#allocation2 + $0x34] sm:$0x1]
  %v438 = vld [vmem:[#allocation2 + $0x38] sm:$0xf]
  %v439 = vld [vmem:[#allocation2 + $0x3c] sm:$0x1]
  %v440 = vld [vmem:[#allocation2 + $0x40] sm:$0xf]
  %v441 = vld [vmem:[#allocation2 + $0x44] sm:$0x1]
  %v442 = vld [vmem:[#allocation2 + $0x48] sm:$0xf]
  %v443 = vld [vmem:[#allocation2 + $0x4c] sm:$0x1]
  %v444 = vld [vmem:[#allocation2 + $0x50] sm:$0xf]
  %v445 = vld [vmem:[#allocation2 + $0x54] sm:$0x1]
  %v446 = vld [vmem:[#allocation2 + $0x58] sm:$0xf]
  %v447 = vld [vmem:[#allocation2 + $0x5c] sm:$0x1]
  %v448 = vld [vmem:[#allocation2 + $0x60] sm:$0xf]
  %v449 = vld [vmem:[#allocation2 + $0x64] sm:$0x1]
  %v450 = vld [vmem:[#allocation2 + $0x68] sm:$0xf]
  %v451 = vld [vmem:[#allocation2 + $0x6c] sm:$0x1]
  %v452 = vld [vmem:[#allocation2 + $0x70] sm:$0xf]
  %v453 = vld [vmem:[#allocation2 + $0x74] sm:$0x1]
  %v454 = vld [vmem:[#allocation2 + $0x78] sm:$0xf]
  %v455 = vld [vmem:[#allocation2 + $0x7c] sm:$0x1]
  %v456 = vld [vmem:[#allocation2 + $0x80] sm:$0xf]
  %v457 = vld [vmem:[#allocation2 + $0x84] sm:$0x1]
  %v458 = vld [vmem:[#allocation2 + $0x88] sm:$0xf]
  %v459 = vld [vmem:[#allocation2 + $0x8c] sm:$0x1]
  %v460 = vld [vmem:[#allocation2 + $0x90] sm:$0xf]
  %v461 = vld [vmem:[#allocation2 + $0x94] sm:$0x1]
  %v462 = vld [vmem:[#allocation2 + $0x98] sm:$0xf]
  %v463 = vld [vmem:[#allocation2 + $0x9c] sm:$0x1]
  %vm464 = vsmask.f32 3328
  %vm465 = vsmask.f32 7440
  %vm466 = vmor %vm464, %vm465
  %v468 = vshrl.u32 %v424, 16
  %v470 = vrot.slane %v468, 4
  %v471 = vshll.u32 %v424, 16
  %v473 = vrot.slane %v471, 5
  %v474 = vor.u32 %v470, %v473
  %v475 = vrot.slane %v474, 4
  %v477 = vshll.u32 %v425, 16
  %v479 = vrot.slane %v477, 5
  %v480 = vsel %vm466, %v475, %v479
  %v482 = vshrl.u32 %v426, 16
  %v484 = vrot.slane %v482, 4
  %v485 = vshll.u32 %v426, 16
  %v487 = vrot.slane %v485, 5
  %v488 = vor.u32 %v484, %v487
  %v489 = vrot.slane %v488, 4
  %v491 = vshll.u32 %v427, 16
  %v493 = vrot.slane %v491, 5
  %v494 = vsel %vm466, %v489, %v493
  %v496 = vshrl.u32 %v428, 16
  %v498 = vrot.slane %v496, 4
  %v499 = vshll.u32 %v428, 16
  %v501 = vrot.slane %v499, 5
  %v502 = vor.u32 %v498, %v501
  %v503 = vrot.slane %v502, 4
  %v505 = vshll.u32 %v429, 16
  %v507 = vrot.slane %v505, 5
  %v508 = vsel %vm466, %v503, %v507
  %v510 = vshrl.u32 %v430, 16
  %v512 = vrot.slane %v510, 4
  %v513 = vshll.u32 %v430, 16
  %v515 = vrot.slane %v513, 5
  %v516 = vor.u32 %v512, %v515
  %v517 = vrot.slane %v516, 4
  %v519 = vshll.u32 %v431, 16
  %v521 = vrot.slane %v519, 5
  %v522 = vsel %vm466, %v517, %v521
  %v524 = vshrl.u32 %v432, 16
  %v526 = vrot.slane %v524, 4
  %v527 = vshll.u32 %v432, 16
  %v529 = vrot.slane %v527, 5
  %v530 = vor.u32 %v526, %v529
  %v531 = vrot.slane %v530, 4
  %v533 = vshll.u32 %v433, 16
  %v535 = vrot.slane %v533, 5
  %v536 = vsel %vm466, %v531, %v535
  %v538 = vshrl.u32 %v434, 16
  %v540 = vrot.slane %v538, 4
  %v541 = vshll.u32 %v434, 16
  %v543 = vrot.slane %v541, 5
  %v544 = vor.u32 %v540, %v543
  %v545 = vrot.slane %v544, 4
  %v547 = vshll.u32 %v435, 16
  %v549 = vrot.slane %v547, 5
  %v550 = vsel %vm466, %v545, %v549
  %v552 = vshrl.u32 %v436, 16
  %v554 = vrot.slane %v552, 4
  %v555 = vshll.u32 %v436, 16
  %v557 = vrot.slane %v555, 5
  %v558 = vor.u32 %v554, %v557
  %v559 = vrot.slane %v558, 4
  %v561 = vshll.u32 %v437, 16
  %v563 = vrot.slane %v561, 5
  %v564 = vsel %vm466, %v559, %v563
  %v566 = vshrl.u32 %v438, 16
  %v568 = vrot.slane %v566, 4
  %v569 = vshll.u32 %v438, 16
  %v571 = vrot.slane %v569, 5
  %v572 = vor.u32 %v568, %v571
  %v573 = vrot.slane %v572, 4
  %v575 = vshll.u32 %v439, 16
  %v577 = vrot.slane %v575, 5
  %v578 = vsel %vm466, %v573, %v577
  %v580 = vshrl.u32 %v444, 16
  %v582 = vrot.slane %v580, 4
  %v583 = vshll.u32 %v444, 16
  %v585 = vrot.slane %v583, 5
  %v586 = vor.u32 %v582, %v585
  %v587 = vrot.slane %v586, 4
  %v589 = vshll.u32 %v445, 16
  %v591 = vrot.slane %v589, 5
  %v592 = vsel %vm466, %v587, %v591
  %v594 = vshrl.u32 %v446, 16
  %v596 = vrot.slane %v594, 4
  %v597 = vshll.u32 %v446, 16
  %v599 = vrot.slane %v597, 5
  %v600 = vor.u32 %v596, %v599
  %v601 = vrot.slane %v600, 4
  %v603 = vshll.u32 %v447, 16
  %v605 = vrot.slane %v603, 5
  %v606 = vsel %vm466, %v601, %v605
  %v608 = vshrl.u32 %v448, 16
  %v610 = vrot.slane %v608, 4
  %v611 = vshll.u32 %v448, 16
  %v613 = vrot.slane %v611, 5
  %v614 = vor.u32 %v610, %v613
  %v615 = vrot.slane %v614, 4
  %v617 = vshll.u32 %v449, 16
  %v619 = vrot.slane %v617, 5
  %v620 = vsel %vm466, %v615, %v619
  %v622 = vshrl.u32 %v450, 16
  %v624 = vrot.slane %v622, 4
  %v625 = vshll.u32 %v450, 16
  %v627 = vrot.slane %v625, 5
  %v628 = vor.u32 %v624, %v627
  %v629 = vrot.slane %v628, 4
  %v631 = vshll.u32 %v451, 16
  %v633 = vrot.slane %v631, 5
  %v634 = vsel %vm466, %v629, %v633
  %v636 = vshrl.u32 %v452, 16
  %v638 = vrot.slane %v636, 4
  %v639 = vshll.u32 %v452, 16
  %v641 = vrot.slane %v639, 5
  %v642 = vor.u32 %v638, %v641
  %v643 = vrot.slane %v642, 4
  %v645 = vshll.u32 %v453, 16
  %v647 = vrot.slane %v645, 5
  %v648 = vsel %vm466, %v643, %v647
  %v650 = vshrl.u32 %v454, 16
  %v652 = vrot.slane %v650, 4
  %v653 = vshll.u32 %v454, 16
  %v655 = vrot.slane %v653, 5
  %v656 = vor.u32 %v652, %v655
  %v657 = vrot.slane %v656, 4
  %v659 = vshll.u32 %v455, 16
  %v661 = vrot.slane %v659, 5
  %v662 = vsel %vm466, %v657, %v661
  %v664 = vshrl.u32 %v456, 16
  %v666 = vrot.slane %v664, 4
  %v667 = vshll.u32 %v456, 16
  %v669 = vrot.slane %v667, 5
  %v670 = vor.u32 %v666, %v669
  %v671 = vrot.slane %v670, 4
  %v673 = vshll.u32 %v457, 16
  %v675 = vrot.slane %v673, 5
  %v676 = vsel %vm466, %v671, %v675
  %v678 = vshrl.u32 %v458, 16
  %v680 = vrot.slane %v678, 4
  %v681 = vshll.u32 %v458, 16
  %v683 = vrot.slane %v681, 5
  %v684 = vor.u32 %v680, %v683
  %v685 = vrot.slane %v684, 4
  %v687 = vshll.u32 %v459, 16
  %v689 = vrot.slane %v687, 5
  %v690 = vsel %vm466, %v685, %v689
  %vm723 = vcmask 1042432
  %vm724 = vcmask 1046532
  %vm725 = vmor %vm723, %vm724
  %v726 = vrot.slane %v424, 5
  %v727 = vrot.slane %v726, 4
  %v728 = vrot.slane %v425, 5
  %v729 = vsel %vm725, %v727, %v728
  %v730 = vrot.slane %v426, 5
  %v731 = vrot.slane %v730, 4
  %v732 = vrot.slane %v427, 5
  %v733 = vsel %vm725, %v731, %v732
  %v734 = vrot.slane %v428, 5
  %v735 = vrot.slane %v734, 4
  %v736 = vrot.slane %v429, 5
  %v737 = vsel %vm725, %v735, %v736
  %v738 = vrot.slane %v430, 5
  %v739 = vrot.slane %v738, 4
  %v740 = vrot.slane %v431, 5
  %v741 = vsel %vm725, %v739, %v740
  %v742 = vrot.slane %v432, 5
  %v743 = vrot.slane %v742, 4
  %v744 = vrot.slane %v433, 5
  %v745 = vsel %vm725, %v743, %v744
  %v746 = vrot.slane %v434, 5
  %v747 = vrot.slane %v746, 4
  %v748 = vrot.slane %v435, 5
  %v749 = vsel %vm725, %v747, %v748
  %v750 = vrot.slane %v436, 5
  %v751 = vrot.slane %v750, 4
  %v752 = vrot.slane %v437, 5
  %v753 = vsel %vm725, %v751, %v752
  %v754 = vrot.slane %v438, 5
  %v755 = vrot.slane %v754, 4
  %v756 = vrot.slane %v439, 5
  %v757 = vsel %vm725, %v755, %v756
  %v758 = vrot.slane %v444, 5
  %v759 = vrot.slane %v758, 4
  %v760 = vrot.slane %v445, 5
  %v761 = vsel %vm725, %v759, %v760
  %v762 = vrot.slane %v446, 5
  %v763 = vrot.slane %v762, 4
  %v764 = vrot.slane %v447, 5
  %v765 = vsel %vm725, %v763, %v764
  %v766 = vrot.slane %v448, 5
  %v767 = vrot.slane %v766, 4
  %v768 = vrot.slane %v449, 5
  %v769 = vsel %vm725, %v767, %v768
  %v770 = vrot.slane %v450, 5
  %v771 = vrot.slane %v770, 4
  %v772 = vrot.slane %v451, 5
  %v773 = vsel %vm725, %v771, %v772
  %v774 = vrot.slane %v452, 5
  %v775 = vrot.slane %v774, 4
  %v776 = vrot.slane %v453, 5
  %v777 = vsel %vm725, %v775, %v776
  %v778 = vrot.slane %v454, 5
  %v779 = vrot.slane %v778, 4
  %v780 = vrot.slane %v455, 5
  %v781 = vsel %vm725, %v779, %v780
  %v782 = vrot.slane %v456, 5
  %v783 = vrot.slane %v782, 4
  %v784 = vrot.slane %v457, 5
  %v785 = vsel %vm725, %v783, %v784
  %v786 = vrot.slane %v458, 5
  %v787 = vrot.slane %v786, 4
  %v788 = vrot.slane %v459, 5
  %v789 = vsel %vm725, %v787, %v788
  %v791 = vshrl.u32 %v440, 16
  %v793 = vrot.slane %v791, 4
  %v794 = vshll.u32 %v440, 16
  %v796 = vrot.slane %v794, 5
  %v797 = vor.u32 %v793, %v796
  %v798 = vrot.slane %v797, 4
  %v800 = vshll.u32 %v441, 16
  %v802 = vrot.slane %v800, 5
  %v803 = vsel %vm466, %v798, %v802
  %v805 = vshrl.u32 %v460, 16
  %v807 = vrot.slane %v805, 4
  %v808 = vshll.u32 %v460, 16
  %v810 = vrot.slane %v808, 5
  %v811 = vor.u32 %v807, %v810
  %v812 = vrot.slane %v811, 4
  %v814 = vshll.u32 %v461, 16
  %v816 = vrot.slane %v814, 5
  %v817 = vsel %vm466, %v812, %v816
  %v822 = vrot.slane %v440, 5
  %v823 = vrot.slane %v822, 4
  %v824 = vrot.slane %v441, 5
  %v825 = vsel %vm725, %v823, %v824
  %v826 = vrot.slane %v460, 5
  %v827 = vrot.slane %v826, 4
  %v828 = vrot.slane %v461, 5
  %v829 = vsel %vm725, %v827, %v828
  %v831 = vshrl.u32 %v442, 16
  %v833 = vrot.slane %v831, 4
  %v834 = vshll.u32 %v442, 16
  %v836 = vrot.slane %v834, 5
  %v837 = vor.u32 %v833, %v836
  %v838 = vrot.slane %v837, 4
  %v840 = vshll.u32 %v443, 16
  %v842 = vrot.slane %v840, 5
  %v843 = vsel %vm466, %v838, %v842
  %v845 = vshrl.u32 %v462, 16
  %v847 = vrot.slane %v845, 4
  %v848 = vshll.u32 %v462, 16
  %v850 = vrot.slane %v848, 5
  %v851 = vor.u32 %v847, %v850
  %v852 = vrot.slane %v851, 4
  %v854 = vshll.u32 %v463, 16
  %v856 = vrot.slane %v854, 5
  %v857 = vsel %vm466, %v852, %v856
  %v862 = vrot.slane %v442, 5
  %v863 = vrot.slane %v862, 4
  %v864 = vrot.slane %v443, 5
  %v865 = vsel %vm725, %v863, %v864
  %v866 = vrot.slane %v462, 5
  %v867 = vrot.slane %v866, 4
  %v868 = vrot.slane %v463, 5
  %v869 = vsel %vm725, %v867, %v868
  %v870 = vunpack.c.l.b16 %v424
  %v871 = vunpack.c.l.b16 %v426
  %v872 = vunpack.c.l.b16 %v428
  %v873 = vunpack.c.l.b16 %v430
  %v874 = vunpack.c.l.b16 %v432
  %v875 = vunpack.c.l.b16 %v434
  %v876 = vunpack.c.l.b16 %v436
  %v877 = vunpack.c.l.b16 %v438
  %v878 = vunpack.c.l.b16 %v444
  %v879 = vunpack.c.l.b16 %v446
  %v880 = vunpack.c.l.b16 %v448
  %v881 = vunpack.c.l.b16 %v450
  %v882 = vunpack.c.l.b16 %v452
  %v883 = vunpack.c.l.b16 %v454
  %v884 = vunpack.c.l.b16 %v456
  %v885 = vunpack.c.l.b16 %v458
  %v886 = vpack.c.b16 %v871, %v870
  %v887 = vpack.c.b16 %v873, %v872
  %v888 = vpack.c.b16 %v875, %v874
  %v889 = vpack.c.b16 %v877, %v876
  %v890 = vpack.c.b16 %v879, %v878
  %v891 = vpack.c.b16 %v881, %v880
  %v892 = vpack.c.b16 %v883, %v882
  %v893 = vpack.c.b16 %v885, %v884
  %v902 = vunpack.c.l.b16 %v480
  %v903 = vunpack.c.l.b16 %v494
  %v904 = vunpack.c.l.b16 %v508
  %v905 = vunpack.c.l.b16 %v522
  %v906 = vunpack.c.l.b16 %v536
  %v907 = vunpack.c.l.b16 %v550
  %v908 = vunpack.c.l.b16 %v564
  %v909 = vunpack.c.l.b16 %v578
  %v910 = vunpack.c.l.b16 %v592
  %v911 = vunpack.c.l.b16 %v606
  %v912 = vunpack.c.l.b16 %v620
  %v913 = vunpack.c.l.b16 %v634
  %v914 = vunpack.c.l.b16 %v648
  %v915 = vunpack.c.l.b16 %v662
  %v916 = vunpack.c.l.b16 %v676
  %v917 = vunpack.c.l.b16 %v690
  %v918 = vpack.c.b16 %v903, %v902
  %v919 = vpack.c.b16 %v905, %v904
  %v920 = vpack.c.b16 %v907, %v906
  %v921 = vpack.c.b16 %v909, %v908
  %v922 = vpack.c.b16 %v911, %v910
  %v923 = vpack.c.b16 %v913, %v912
  %v924 = vpack.c.b16 %v915, %v914
  %v925 = vpack.c.b16 %v917, %v916
  %v934 = vunpack.c.l.b16 %v729
  %v935 = vunpack.c.l.b16 %v733
  %v936 = vunpack.c.l.b16 %v737
  %v937 = vunpack.c.l.b16 %v741
  %v938 = vunpack.c.l.b16 %v745
  %v939 = vunpack.c.l.b16 %v749
  %v940 = vunpack.c.l.b16 %v753
  %v941 = vunpack.c.l.b16 %v757
  %v942 = vunpack.c.l.b16 %v761
  %v943 = vunpack.c.l.b16 %v765
  %v944 = vunpack.c.l.b16 %v769
  %v945 = vunpack.c.l.b16 %v773
  %v946 = vunpack.c.l.b16 %v777
  %v947 = vunpack.c.l.b16 %v781
  %v948 = vunpack.c.l.b16 %v785
  %v949 = vunpack.c.l.b16 %v789
  %v950 = vpack.c.b16 %v935, %v934
  %v951 = vpack.c.b16 %v937, %v936
  %v952 = vpack.c.b16 %v939, %v938
  %v953 = vpack.c.b16 %v941, %v940
  %v954 = vpack.c.b16 %v943, %v942
  %v955 = vpack.c.b16 %v945, %v944
  %v956 = vpack.c.b16 %v947, %v946
  %v957 = vpack.c.b16 %v949, %v948
  %v966 = vunpack.c.l.b16 %v440
  %v967 = vunpack.c.l.b16 %v460
  %v968 = vpack.c.b16 %v872, %v871
  %v969 = vpack.c.b16 %v874, %v873
  %v970 = vpack.c.b16 %v876, %v875
  %v971 = vpack.c.b16 %v966, %v877
  %v972 = vpack.c.b16 %v880, %v879
  %v973 = vpack.c.b16 %v882, %v881
  %v974 = vpack.c.b16 %v884, %v883
  %v975 = vpack.c.b16 %v967, %v885
  %v984 = vunpack.c.l.b16 %v803
  %v985 = vunpack.c.l.b16 %v817
  %v986 = vpack.c.b16 %v904, %v903
  %v987 = vpack.c.b16 %v906, %v905
  %v988 = vpack.c.b16 %v908, %v907
  %v989 = vpack.c.b16 %v984, %v909
  %v990 = vpack.c.b16 %v912, %v911
  %v991 = vpack.c.b16 %v914, %v913
  %v992 = vpack.c.b16 %v916, %v915
  %v993 = vpack.c.b16 %v985, %v917
  %v1002 = vunpack.c.l.b16 %v825
  %v1003 = vunpack.c.l.b16 %v829
  %v1004 = vpack.c.b16 %v936, %v935
  %v1005 = vpack.c.b16 %v938, %v937
  %v1006 = vpack.c.b16 %v940, %v939
  %v1007 = vpack.c.b16 %v1002, %v941
  %v1008 = vpack.c.b16 %v944, %v943
  %v1009 = vpack.c.b16 %v946, %v945
  %v1010 = vpack.c.b16 %v948, %v947
  %v1011 = vpack.c.b16 %v1003, %v949
  %v1020 = vunpack.c.l.b16 %v442
  %v1021 = vunpack.c.l.b16 %v462
  %v1022 = vpack.c.b16 %v1020, %v966
  %v1023 = vpack.c.b16 %v1021, %v967
  %v1026 = vunpack.c.l.b16 %v843
  %v1027 = vunpack.c.l.b16 %v857
  %v1028 = vpack.c.b16 %v1026, %v984
  %v1029 = vpack.c.b16 %v1027, %v985
  %v1032 = vunpack.c.l.b16 %v865
  %v1033 = vunpack.c.l.b16 %v869
  %v1034 = vpack.c.b16 %v1032, %v1002
  %v1035 = vpack.c.b16 %v1033, %v1003
  %v1038 = vld [vmem:[%s1] sm:$0xf]
  %v1039 = vld [vmem:[%s1 + $0x4] sm:$0xf]
  %v1040 = vld [vmem:[%s1 + $0x8] sm:$0xf]
  %v1041 = vld [vmem:[%s1 + $0xc] sm:$0xf]
  %v1042 = vld [vmem:[%s1 + $0x10] sm:$0xf]
  %v1043 = vld [vmem:[%s1 + $0x14] sm:$0xf]
  %v1044 = vld [vmem:[%s1 + $0x18] sm:$0xf]
  %v1045 = vld [vmem:[%s1 + $0x1c] sm:$0xf]
  %v1046 = vld [vmem:[%s1 + $0x20] sm:$0xf]
  %v1047 = vld [vmem:[%s1 + $0x24] sm:$0xf]
  %v1048 = vld [vmem:[%s1 + $0x28] sm:$0xf]
  %v1049 = vld [vmem:[%s1 + $0x2c] sm:$0xf]
  %v1050 = vld [vmem:[%s1 + $0x30] sm:$0xf]
  %v1051 = vld [vmem:[%s1 + $0x34] sm:$0xf]
  %v1052 = vld [vmem:[%s1 + $0x38] sm:$0xf]
  %v1053 = vld [vmem:[%s1 + $0x3c] sm:$0xf]
  %v1054 = vld [vmem:[%s1 + $0x40] sm:$0xf]
  %v1055 = vld [vmem:[%s1 + $0x44] sm:$0xf]
  %v1056 = vld [vmem:[%s1 + $0x48] sm:$0xf]
  %v1057 = vld [vmem:[%s1 + $0x4c] sm:$0xf]
  %v1058 = vld [vmem:[%s1 + $0x50] sm:$0xf]
  %v1059 = vld [vmem:[%s1 + $0x54] sm:$0xf]
  %v1060 = vld [vmem:[%s1 + $0x58] sm:$0xf]
  %v1061 = vld [vmem:[%s1 + $0x5c] sm:$0xf]
  %v1062 = vld [vmem:[%s1 + $0x60] sm:$0xf]
  %v1063 = vld [vmem:[%s1 + $0x64] sm:$0xf]
  %v1064 = vld [vmem:[%s1 + $0x68] sm:$0xf]
  %v1065 = vld [vmem:[%s1 + $0x6c] sm:$0xf]
  %v1066 = vld [vmem:[%s1 + $0x70] sm:$0xf]
  %v1067 = vld [vmem:[%s1 + $0x74] sm:$0xf]
  %v1068 = vld [vmem:[%s1 + $0x78] sm:$0xf]
  %v1069 = vld [vmem:[%s1 + $0x7c] sm:$0xf]
  %v1070 = vld [vmem:[%s1 + $0x80] sm:$0xf]
  %v1071 = vld [vmem:[%s1 + $0x84] sm:$0xf]
  %v1072 = vld [vmem:[%s1 + $0x88] sm:$0xf]
  %v1073 = vld [vmem:[%s1 + $0x8c] sm:$0xf]
  %v1074 = vld [vmem:[%s1 + $0x90] sm:$0xf]
  %v1075 = vld [vmem:[%s1 + $0x94] sm:$0xf]
  %v1076 = vld [vmem:[%s1 + $0x98] sm:$0xf]
  %v1077 = vld [vmem:[%s1 + $0x9c] sm:$0xf]
  %v1078 = vld [vmem:[%s1 + $0xa0] sm:$0xf]
  %v1079 = vld [vmem:[%s1 + $0xa4] sm:$0xf]
  %v1080 = vld [vmem:[%s1 + $0xa8] sm:$0xf]
  %v1081 = vld [vmem:[%s1 + $0xac] sm:$0xf]
  %v1082 = vld [vmem:[%s1 + $0xb0] sm:$0xf]
  %v1083 = vld [vmem:[%s1 + $0xb4] sm:$0xf]
  %v1084 = vld [vmem:[%s1 + $0xb8] sm:$0xf]
  %v1085 = vld [vmem:[%s1 + $0xbc] sm:$0xf]
  %v1086 = vld [vmem:[%s1 + $0xc0] sm:$0xf]
  %v1087 = vld [vmem:[%s1 + $0xc4] sm:$0xf]
  %v1088 = vld [vmem:[%s1 + $0xc8] sm:$0xf]
  %v1089 = vld [vmem:[%s1 + $0xcc] sm:$0xf]
  %v1090 = vld [vmem:[%s1 + $0xd0] sm:$0xf]
  %v1091 = vld [vmem:[%s1 + $0xd4] sm:$0xf]
  %v1092 = vld [vmem:[%s1 + $0xd8] sm:$0xf]
  %v1093 = vld [vmem:[%s1 + $0xdc] sm:$0xf]
  %v1094 = vld [vmem:[%s1 + $0xe0] sm:$0xf]
  %v1095 = vld [vmem:[%s1 + $0xe4] sm:$0xf]
  %v1096 = vld [vmem:[%s1 + $0xe8] sm:$0xf]
  %v1097 = vld [vmem:[%s1 + $0xec] sm:$0xf]
  %v1098 = vld [vmem:[%s1 + $0xf0] sm:$0xf]
  %v1099 = vld [vmem:[%s1 + $0xf4] sm:$0xf]
  %v1100 = vld [vmem:[%s1 + $0xf8] sm:$0xf]
  %v1101 = vld [vmem:[%s1 + $0xfc] sm:$0xf]
  %v1102 = vld [vmem:[%s1 + $0x100] sm:$0xf]
  %v1103 = vld [vmem:[%s1 + $0x104] sm:$0xf]
  %v1104 = vld [vmem:[%s1 + $0x108] sm:$0xf]
  %v1105 = vld [vmem:[%s1 + $0x10c] sm:$0xf]
  %v1106 = vld [vmem:[%s1 + $0x110] sm:$0xf]
  %v1107 = vld [vmem:[%s1 + $0x114] sm:$0xf]
  %v1108 = vld [vmem:[%s1 + $0x118] sm:$0xf]
  %v1109 = vld [vmem:[%s1 + $0x11c] sm:$0xf]
  %v1110 = vld [vmem:[%s1 + $0x120] sm:$0xf]
  %v1111 = vld [vmem:[%s1 + $0x124] sm:$0xf]
  %v1112 = vld [vmem:[%s1 + $0x128] sm:$0xf]
  %v1113 = vld [vmem:[%s1 + $0x12c] sm:$0xf]
  %v1114 = vld [vmem:[%s1 + $0x130] sm:$0xf]
  %v1115 = vld [vmem:[%s1 + $0x134] sm:$0xf]
  %v1116 = vld [vmem:[%s1 + $0x138] sm:$0xf]
  %v1117 = vld [vmem:[%s1 + $0x13c] sm:$0xf]
  %v1118 = vld [vmem:[%s1 + $0x140] sm:$0xf]
  %v1119 = vld [vmem:[%s1 + $0x144] sm:$0xf]
  %v1120 = vld [vmem:[%s1 + $0x148] sm:$0xf]
  %v1121 = vld [vmem:[%s1 + $0x14c] sm:$0xf]
  %v1122 = vld [vmem:[%s1 + $0x150] sm:$0xf]
  %v1123 = vld [vmem:[%s1 + $0x154] sm:$0xf]
  %v1124 = vld [vmem:[%s1 + $0x158] sm:$0xf]
  %v1125 = vld [vmem:[%s1 + $0x15c] sm:$0xf]
  %v1126 = vld [vmem:[%s1 + $0x160] sm:$0xf]
  %v1127 = vld [vmem:[%s1 + $0x164] sm:$0xf]
  %v1128 = vld [vmem:[%s1 + $0x168] sm:$0xf]
  %v1129 = vld [vmem:[%s1 + $0x16c] sm:$0xf]
  %v1130 = vld [vmem:[%s1 + $0x170] sm:$0xf]
  %v1131 = vld [vmem:[%s1 + $0x174] sm:$0xf]
  %v1132 = vld [vmem:[%s1 + $0x178] sm:$0xf]
  %v1133 = vld [vmem:[%s1 + $0x17c] sm:$0xf]
  %v1134 = vld [vmem:[%s1 + $0x180] sm:$0xf]
  %v1135 = vld [vmem:[%s1 + $0x184] sm:$0xf]
  %v1136 = vld [vmem:[%s1 + $0x188] sm:$0xf]
  %v1137 = vld [vmem:[%s1 + $0x18c] sm:$0xf]
  %v1138 = vld [vmem:[%s1 + $0x190] sm:$0xf]
  %v1139 = vld [vmem:[%s1 + $0x194] sm:$0xf]
  %v1140 = vld [vmem:[%s1 + $0x198] sm:$0xf]
  %v1141 = vld [vmem:[%s1 + $0x19c] sm:$0xf]
  %v1142 = vld [vmem:[%s1 + $0x1a0] sm:$0xf]
  %v1143 = vld [vmem:[%s1 + $0x1a4] sm:$0xf]
  %v1144 = vld [vmem:[%s1 + $0x1a8] sm:$0xf]
  %v1145 = vld [vmem:[%s1 + $0x1ac] sm:$0xf]
  %v1146 = vld [vmem:[%s1 + $0x1b0] sm:$0xf]
  %v1147 = vld [vmem:[%s1 + $0x1b4] sm:$0xf]
  %v1148 = vld [vmem:[%s1 + $0x1b8] sm:$0xf]
  %v1149 = vld [vmem:[%s1 + $0x1bc] sm:$0xf]
  %v1150 = vld [vmem:[%s1 + $0x1c0] sm:$0xf]
  %v1151 = vld [vmem:[%s1 + $0x1c4] sm:$0xf]
  %v1152 = vld [vmem:[%s1 + $0x1c8] sm:$0xf]
  %v1153 = vld [vmem:[%s1 + $0x1cc] sm:$0xf]
  %v1154 = vld [vmem:[%s1 + $0x1d0] sm:$0xf]
  %v1155 = vld [vmem:[%s1 + $0x1d4] sm:$0xf]
  %v1156 = vld [vmem:[%s1 + $0x1d8] sm:$0xf]
  %v1157 = vld [vmem:[%s1 + $0x1dc] sm:$0xf]
  %v1158 = vld [vmem:[%s1 + $0x1e0] sm:$0xf]
  %v1159 = vld [vmem:[%s1 + $0x1e4] sm:$0xf]
  %v1160 = vld [vmem:[%s1 + $0x1e8] sm:$0xf]
  %v1161 = vld [vmem:[%s1 + $0x1ec] sm:$0xf]
  %v1162 = vld [vmem:[%s1 + $0x1f0] sm:$0xf]
  %v1163 = vld [vmem:[%s1 + $0x1f4] sm:$0xf]
  %v1164 = vld [vmem:[%s1 + $0x1f8] sm:$0xf]
  %v1165 = vld [vmem:[%s1 + $0x1fc] sm:$0xf]
  %v1166 = vld [vmem:[%s1 + $0x200] sm:$0xf]
  %v1167 = vld [vmem:[%s1 + $0x204] sm:$0xf]
  %v1168 = vld [vmem:[%s1 + $0x208] sm:$0xf]
  %v1169 = vld [vmem:[%s1 + $0x20c] sm:$0xf]
  %v1170 = vld [vmem:[%s1 + $0x210] sm:$0xf]
  %v1171 = vld [vmem:[%s1 + $0x214] sm:$0xf]
  %v1172 = vld [vmem:[%s1 + $0x218] sm:$0xf]
  %v1173 = vld [vmem:[%s1 + $0x21c] sm:$0xf]
  %v1174 = vld [vmem:[%s1 + $0x220] sm:$0xf]
  %v1175 = vld [vmem:[%s1 + $0x224] sm:$0xf]
  %v1176 = vld [vmem:[%s1 + $0x228] sm:$0xf]
  %v1177 = vld [vmem:[%s1 + $0x22c] sm:$0xf]
  %v1178 = vld [vmem:[%s1 + $0x230] sm:$0xf]
  %v1179 = vld [vmem:[%s1 + $0x234] sm:$0xf]
  %v1180 = vld [vmem:[%s1 + $0x238] sm:$0xf]
  %v1181 = vld [vmem:[%s1 + $0x23c] sm:$0xf]
  %v1182 = vld [vmem:[%s2] sm:$0x1]
  %v1184 = vlaneseq
  %v1185 = vshrl.u32 %v1184, 7
  %v1186 = vsub.s32 0, %v1185
  %v1187 = vrot.slane %v1182, %v1186
  %v1333 = vunpack.c.l.b16 %v1038
  %v1334 = vunpack.c.l.b16 %v1039
  %v1335 = vunpack.c.l.b16 %v1040
  %v1336 = vunpack.c.l.b16 %v1041
  %v1337 = vunpack.c.l.b16 %v1042
  %v1338 = vunpack.c.l.b16 %v1043
  %v1339 = vunpack.c.l.b16 %v1044
  %v1340 = vunpack.c.l.b16 %v1045
  %v1341 = vunpack.c.l.b16 %v1046
  %v1342 = vunpack.c.l.b16 %v1047
  %v1343 = vunpack.c.l.b16 %v1048
  %v1344 = vunpack.c.l.b16 %v1049
  %v1345 = vunpack.c.l.b16 %v1050
  %v1346 = vunpack.c.l.b16 %v1051
  %v1347 = vunpack.c.l.b16 %v1052
  %v1348 = vunpack.c.l.b16 %v1053
  %v1349 = vunpack.c.l.b16 %v1054
  %v1350 = vunpack.c.l.b16 %v1055
  %v1351 = vunpack.c.l.b16 %v1056
  %v1352 = vunpack.c.l.b16 %v1057
  %v1353 = vunpack.c.l.b16 %v1058
  %v1354 = vunpack.c.l.b16 %v1059
  %v1355 = vunpack.c.l.b16 %v1060
  %v1356 = vunpack.c.l.b16 %v1061
  %v1357 = vunpack.c.l.b16 %v1062
  %v1358 = vunpack.c.l.b16 %v1063
  %v1359 = vunpack.c.l.b16 %v1064
  %v1360 = vunpack.c.l.b16 %v1065
  %v1361 = vunpack.c.l.b16 %v1066
  %v1362 = vunpack.c.l.b16 %v1067
  %v1363 = vunpack.c.l.b16 %v1068
  %v1364 = vunpack.c.l.b16 %v1069
  %v1365 = vunpack.c.l.b16 %v1070
  %v1366 = vunpack.c.l.b16 %v1071
  %v1367 = vunpack.c.l.b16 %v1072
  %v1368 = vunpack.c.l.b16 %v1073
  %v1369 = vunpack.c.l.b16 %v1074
  %v1370 = vunpack.c.l.b16 %v1075
  %v1371 = vunpack.c.l.b16 %v1076
  %v1372 = vunpack.c.l.b16 %v1077
  %v1373 = vunpack.c.l.b16 %v1078
  %v1374 = vunpack.c.l.b16 %v1079
  %v1375 = vunpack.c.l.b16 %v1080
  %v1376 = vunpack.c.l.b16 %v1081
  %v1377 = vunpack.c.l.b16 %v1082
  %v1378 = vunpack.c.l.b16 %v1083
  %v1379 = vunpack.c.l.b16 %v1084
  %v1380 = vunpack.c.l.b16 %v1085
  %v1381 = vunpack.c.l.b16 %v1086
  %v1382 = vunpack.c.l.b16 %v1087
  %v1383 = vunpack.c.l.b16 %v1088
  %v1384 = vunpack.c.l.b16 %v1089
  %v1385 = vunpack.c.l.b16 %v1090
  %v1386 = vunpack.c.l.b16 %v1091
  %v1387 = vunpack.c.l.b16 %v1092
  %v1388 = vunpack.c.l.b16 %v1093
  %v1389 = vunpack.c.l.b16 %v1094
  %v1390 = vunpack.c.l.b16 %v1095
  %v1391 = vunpack.c.l.b16 %v1096
  %v1392 = vunpack.c.l.b16 %v1097
  %v1393 = vunpack.c.l.b16 %v1098
  %v1394 = vunpack.c.l.b16 %v1099
  %v1395 = vunpack.c.l.b16 %v1100
  %v1396 = vunpack.c.l.b16 %v1101
  %v1397 = vunpack.c.l.b16 %v1102
  %v1398 = vunpack.c.l.b16 %v1103
  %v1399 = vunpack.c.l.b16 %v1104
  %v1400 = vunpack.c.l.b16 %v1105
  %v1401 = vunpack.c.l.b16 %v1106
  %v1402 = vunpack.c.l.b16 %v1107
  %v1403 = vunpack.c.l.b16 %v1108
  %v1404 = vunpack.c.l.b16 %v1109
  %v1405 = vunpack.c.l.b16 %v1110
  %v1406 = vunpack.c.l.b16 %v1111
  %v1407 = vunpack.c.l.b16 %v1112
  %v1408 = vunpack.c.l.b16 %v1113
  %v1409 = vunpack.c.l.b16 %v1114
  %v1410 = vunpack.c.l.b16 %v1115
  %v1411 = vunpack.c.l.b16 %v1116
  %v1412 = vunpack.c.l.b16 %v1117
  %v1413 = vunpack.c.l.b16 %v1118
  %v1414 = vunpack.c.l.b16 %v1119
  %v1415 = vunpack.c.l.b16 %v1120
  %v1416 = vunpack.c.l.b16 %v1121
  %v1417 = vunpack.c.l.b16 %v1122
  %v1418 = vunpack.c.l.b16 %v1123
  %v1419 = vunpack.c.l.b16 %v1124
  %v1420 = vunpack.c.l.b16 %v1125
  %v1421 = vunpack.c.l.b16 %v1126
  %v1422 = vunpack.c.l.b16 %v1127
  %v1423 = vunpack.c.l.b16 %v1128
  %v1424 = vunpack.c.l.b16 %v1129
  %v1425 = vunpack.c.l.b16 %v1130
  %v1426 = vunpack.c.l.b16 %v1131
  %v1427 = vunpack.c.l.b16 %v1132
  %v1428 = vunpack.c.l.b16 %v1133
  %v1429 = vunpack.c.l.b16 %v1134
  %v1430 = vunpack.c.l.b16 %v1135
  %v1431 = vunpack.c.l.b16 %v1136
  %v1432 = vunpack.c.l.b16 %v1137
  %v1433 = vunpack.c.l.b16 %v1138
  %v1434 = vunpack.c.l.b16 %v1139
  %v1435 = vunpack.c.l.b16 %v1140
  %v1436 = vunpack.c.l.b16 %v1141
  %v1437 = vunpack.c.l.b16 %v1142
  %v1438 = vunpack.c.l.b16 %v1143
  %v1439 = vunpack.c.l.b16 %v1144
  %v1440 = vunpack.c.l.b16 %v1145
  %v1441 = vunpack.c.l.b16 %v1146
  %v1442 = vunpack.c.l.b16 %v1147
  %v1443 = vunpack.c.l.b16 %v1148
  %v1444 = vunpack.c.l.b16 %v1149
  %v1445 = vunpack.c.l.b16 %v1150
  %v1446 = vunpack.c.l.b16 %v1151
  %v1447 = vunpack.c.l.b16 %v1152
  %v1448 = vunpack.c.l.b16 %v1153
  %v1449 = vunpack.c.l.b16 %v1154
  %v1450 = vunpack.c.l.b16 %v1155
  %v1451 = vunpack.c.l.b16 %v1156
  %v1452 = vunpack.c.l.b16 %v1157
  %v1453 = vunpack.c.l.b16 %v1158
  %v1454 = vunpack.c.l.b16 %v1159
  %v1455 = vunpack.c.l.b16 %v1160
  %v1456 = vunpack.c.l.b16 %v1161
  %v1457 = vunpack.c.l.b16 %v1162
  %v1458 = vunpack.c.l.b16 %v1163
  %v1459 = vunpack.c.l.b16 %v1164
  %v1460 = vunpack.c.l.b16 %v1165
  %v1461 = vunpack.c.l.b16 %v1166
  %v1462 = vunpack.c.l.b16 %v1167
  %v1463 = vunpack.c.l.b16 %v1168
  %v1464 = vunpack.c.l.b16 %v1169
  %v1465 = vunpack.c.l.b16 %v1170
  %v1466 = vunpack.c.l.b16 %v1171
  %v1467 = vunpack.c.l.b16 %v1172
  %v1468 = vunpack.c.l.b16 %v1173
  %v1469 = vunpack.c.l.b16 %v1174
  %v1470 = vunpack.c.l.b16 %v1175
  %v1471 = vunpack.c.l.b16 %v1176
  %v1472 = vunpack.c.l.b16 %v1177
  %v1473 = vunpack.c.l.b16 %v1178
  %v1474 = vunpack.c.l.b16 %v1179
  %v1475 = vunpack.c.l.b16 %v1180
  %v1476 = vunpack.c.l.b16 %v1181
  %v1477 = vpack.c.b16 %v1334, %v1333
  %v1478 = vpack.c.b16 %v1336, %v1335
  %v1479 = vpack.c.b16 %v1338, %v1337
  %v1480 = vpack.c.b16 %v1340, %v1339
  %v1481 = vpack.c.b16 %v1342, %v1341
  %v1482 = vpack.c.b16 %v1344, %v1343
  %v1483 = vpack.c.b16 %v1346, %v1345
  %v1484 = vpack.c.b16 %v1348, %v1347
  %v1485 = vpack.c.b16 %v1350, %v1349
  %v1486 = vpack.c.b16 %v1352, %v1351
  %v1487 = vpack.c.b16 %v1354, %v1353
  %v1488 = vpack.c.b16 %v1356, %v1355
  %v1489 = vpack.c.b16 %v1358, %v1357
  %v1490 = vpack.c.b16 %v1360, %v1359
  %v1491 = vpack.c.b16 %v1362, %v1361
  %v1492 = vpack.c.b16 %v1364, %v1363
  %v1493 = vpack.c.b16 %v1366, %v1365
  %v1494 = vpack.c.b16 %v1368, %v1367
  %v1495 = vpack.c.b16 %v1370, %v1369
  %v1496 = vpack.c.b16 %v1372, %v1371
  %v1497 = vpack.c.b16 %v1374, %v1373
  %v1498 = vpack.c.b16 %v1376, %v1375
  %v1499 = vpack.c.b16 %v1378, %v1377
  %v1500 = vpack.c.b16 %v1380, %v1379
  %v1501 = vpack.c.b16 %v1382, %v1381
  %v1502 = vpack.c.b16 %v1384, %v1383
  %v1503 = vpack.c.b16 %v1386, %v1385
  %v1504 = vpack.c.b16 %v1388, %v1387
  %v1505 = vpack.c.b16 %v1390, %v1389
  %v1506 = vpack.c.b16 %v1392, %v1391
  %v1507 = vpack.c.b16 %v1394, %v1393
  %v1508 = vpack.c.b16 %v1396, %v1395
  %v1509 = vpack.c.b16 %v1398, %v1397
  %v1510 = vpack.c.b16 %v1400, %v1399
  %v1511 = vpack.c.b16 %v1402, %v1401
  %v1512 = vpack.c.b16 %v1404, %v1403
  %v1513 = vpack.c.b16 %v1406, %v1405
  %v1514 = vpack.c.b16 %v1408, %v1407
  %v1515 = vpack.c.b16 %v1410, %v1409
  %v1516 = vpack.c.b16 %v1412, %v1411
  %v1517 = vpack.c.b16 %v1414, %v1413
  %v1518 = vpack.c.b16 %v1416, %v1415
  %v1519 = vpack.c.b16 %v1418, %v1417
  %v1520 = vpack.c.b16 %v1420, %v1419
  %v1521 = vpack.c.b16 %v1422, %v1421
  %v1522 = vpack.c.b16 %v1424, %v1423
  %v1523 = vpack.c.b16 %v1426, %v1425
  %v1524 = vpack.c.b16 %v1428, %v1427
  %v1525 = vpack.c.b16 %v1430, %v1429
  %v1526 = vpack.c.b16 %v1432, %v1431
  %v1527 = vpack.c.b16 %v1434, %v1433
  %v1528 = vpack.c.b16 %v1436, %v1435
  %v1529 = vpack.c.b16 %v1438, %v1437
  %v1530 = vpack.c.b16 %v1440, %v1439
  %v1531 = vpack.c.b16 %v1442, %v1441
  %v1532 = vpack.c.b16 %v1444, %v1443
  %v1533 = vpack.c.b16 %v1446, %v1445
  %v1534 = vpack.c.b16 %v1448, %v1447
  %v1535 = vpack.c.b16 %v1450, %v1449
  %v1536 = vpack.c.b16 %v1452, %v1451
  %v1537 = vpack.c.b16 %v1454, %v1453
  %v1538 = vpack.c.b16 %v1456, %v1455
  %v1539 = vpack.c.b16 %v1458, %v1457
  %v1540 = vpack.c.b16 %v1460, %v1459
  %v1541 = vpack.c.b16 %v1462, %v1461
  %v1542 = vpack.c.b16 %v1464, %v1463
  %v1543 = vpack.c.b16 %v1466, %v1465
  %v1544 = vpack.c.b16 %v1468, %v1467
  %v1545 = vpack.c.b16 %v1470, %v1469
  %v1546 = vpack.c.b16 %v1472, %v1471
  %v1547 = vpack.c.b16 %v1474, %v1473
  %v1548 = vpack.c.b16 %v1476, %v1475
  %1621 = vmatprep.subr.bf16.mxu0 0
  %1622 = vmatpush1.bf16.msra.mxu0 %v1477
  %1623 = vmatprep.subr.bf16.mxu0 0
  %1624 = vmatpush1.bf16.msra.mxu0 %v1478
  %1625 = vmatprep.subr.bf16.mxu0 0
  %1626 = vmatpush1.bf16.msra.mxu0 %v1479
  %1627 = vmatprep.subr.bf16.mxu0 0
  %1628 = vmatpush1.bf16.msra.mxu0 %v1480
  %1629 = vmatprep.subr.bf16.mxu0 0
  %1630 = vmatpush1.bf16.msra.mxu0 %v1481
  %1631 = vmatprep.subr.bf16.mxu0 0
  %1632 = vmatpush1.bf16.msra.mxu0 %v1482
  %1633 = vmatprep.subr.bf16.mxu0 0
  %1634 = vmatpush1.bf16.msra.mxu0 %v1483
  %1635 = vmatprep.subr.bf16.mxu0 0
  %1636 = vmatpush1.bf16.msra.mxu0 %v1484
  %1637 = vmatprep.subr.bf16.mxu0 0
  %1638 = vmatpush1.bf16.msra.mxu0 %v1485
  %1639 = vmatprep.subr.bf16.mxu0 0
  %1640 = vmatpush1.bf16.msra.mxu0 %v1486
  %1641 = vmatprep.subr.bf16.mxu0 0
  %1642 = vmatpush1.bf16.msra.mxu0 %v1487
  %1643 = vmatprep.subr.bf16.mxu0 0
  %1644 = vmatpush1.bf16.msra.mxu0 %v1488
  %1645 = vmatprep.subr.bf16.mxu0 0
  %1646 = vmatpush1.bf16.msra.mxu0 %v1489
  %1647 = vmatprep.subr.bf16.mxu0 0
  %1648 = vmatpush1.bf16.msra.mxu0 %v1490
  %1649 = vmatprep.subr.bf16.mxu0 0
  %1650 = vmatpush1.bf16.msra.mxu0 %v1491
  %1651 = vmatprep.subr.bf16.mxu0 0
  %1652 = vmatpush1.bf16.msra.mxu0 %v1492
  %1653 = vmatprep.mubr.bf16.mxu0 %v918
  %1654 = vmatmul.mubr.bf16.gmra.mrb[0].mxu0 %v886
  %v1655 = vpop.f32.mrb[0].mxu0
  %v1656 = vadd.f32 %v1187, %v1655
  %v1657 = vpop.f32.mrb[0].mxu0
  %v1658 = vpop.f32.mrb[0].mxu0
  %v1659 = vadd.f32 %v1187, %v1658
  %v1660 = vpop.f32.mrb[0].mxu0
  %1661 = vmatprep.mubr.bf16.mxu0 %v919
  %1662 = vmatmul.mubr.bf16.gmra.mrb[0].mxu0 %v887
  %v1663 = vpop.f32.mrb[0].mxu0
  %v1664 = vadd.f32 %v1187, %v1663
  %v1665 = vpop.f32.mrb[0].mxu0
  %v1666 = vpop.f32.mrb[0].mxu0
  %v1667 = vadd.f32 %v1187, %v1666
  %v1668 = vpop.f32.mrb[0].mxu0
  %1669 = vmatprep.mubr.bf16.mxu0 %v920
  %1670 = vmatmul.mubr.bf16.gmra.mrb[0].mxu0 %v888
  %v1671 = vpop.f32.mrb[0].mxu0
  %v1672 = vadd.f32 %v1187, %v1671
  %v1673 = vpop.f32.mrb[0].mxu0
  %v1674 = vpop.f32.mrb[0].mxu0
  %v1675 = vadd.f32 %v1187, %v1674
  %v1676 = vpop.f32.mrb[0].mxu0
  %1677 = vmatprep.mubr.bf16.mxu0 %v921
  %1678 = vmatmul.mubr.bf16.gmra.mrb[0].mxu0 %v889
  %v1679 = vpop.f32.mrb[0].mxu0
  %v1680 = vadd.f32 %v1187, %v1679
  %v1681 = vpop.f32.mrb[0].mxu0
  %v1682 = vpop.f32.mrb[0].mxu0
  %v1683 = vadd.f32 %v1187, %v1682
  %v1684 = vpop.f32.mrb[0].mxu0
  %1685 = vmatprep.mubr.bf16.mxu0 %v922
  %1686 = vmatmul.mubr.bf16.gmra.mrb[0].mxu0 %v890
  %v1687 = vpop.f32.mrb[0].mxu0
  %v1688 = vadd.f32 %v1187, %v1687
  %v1689 = vpop.f32.mrb[0].mxu0
  %v1690 = vpop.f32.mrb[0].mxu0
  %v1691 = vadd.f32 %v1187, %v1690
  %v1692 = vpop.f32.mrb[0].mxu0
  %1693 = vmatprep.mubr.bf16.mxu0 %v923
  %1694 = vmatmul.mubr.bf16.gmra.mrb[0].mxu0 %v891
  %v1695 = vpop.f32.mrb[0].mxu0
  %v1696 = vadd.f32 %v1187, %v1695
  %v1697 = vpop.f32.mrb[0].mxu0
  %v1698 = vpop.f32.mrb[0].mxu0
  %v1699 = vadd.f32 %v1187, %v1698
  %v1700 = vpop.f32.mrb[0].mxu0
  %1701 = vmatprep.mubr.bf16.mxu0 %v924
  %1702 = vmatmul.mubr.bf16.gmra.mrb[0].mxu0 %v892
  %v1703 = vpop.f32.mrb[0].mxu0
  %v1704 = vadd.f32 %v1187, %v1703
  %v1705 = vpop.f32.mrb[0].mxu0
  %v1706 = vpop.f32.mrb[0].mxu0
  %v1707 = vadd.f32 %v1187, %v1706
  %v1708 = vpop.f32.mrb[0].mxu0
  %1709 = vmatprep.mubr.bf16.mxu0 %v925
  %1710 = vmatmul.mubr.bf16.gmra.mrb[0].mxu0 %v893
  %v1711 = vpop.f32.mrb[0].mxu0
  %v1712 = vadd.f32 %v1187, %v1711
  %v1713 = vpop.f32.mrb[0].mxu0
  %v1714 = vpop.f32.mrb[0].mxu0
  %v1715 = vadd.f32 %v1187, %v1714
  %v1716 = vpop.f32.mrb[0].mxu0
  %1717 = vdwg.mxu0
  %1718 = vmatprep.subr.bf16.mxu0 0
  %1719 = vmatpush1.bf16.msra.mxu0 %v1493
  %1720 = vmatprep.subr.bf16.mxu0 0
  %1721 = vmatpush1.bf16.msra.mxu0 %v1494
  %1722 = vmatprep.subr.bf16.mxu0 0
  %1723 = vmatpush1.bf16.msra.mxu0 %v1495
  %1724 = vmatprep.subr.bf16.mxu0 0
  %1725 = vmatpush1.bf16.msra.mxu0 %v1496
  %1726 = vmatprep.subr.bf16.mxu0 0
  %1727 = vmatpush1.bf16.msra.mxu0 %v1497
  %1728 = vmatprep.subr.bf16.mxu0 0
  %1729 = vmatpush1.bf16.msra.mxu0 %v1498
  %1730 = vmatprep.subr.bf16.mxu0 0
  %1731 = vmatpush1.bf16.msra.mxu0 %v1499
  %1732 = vmatprep.subr.bf16.mxu0 0
  %1733 = vmatpush1.bf16.msra.mxu0 %v1500
  %1734 = vmatprep.subr.bf16.mxu0 0
  %1735 = vmatpush1.bf16.msra.mxu0 %v1501
  %1736 = vmatprep.subr.bf16.mxu0 0
  %1737 = vmatpush1.bf16.msra.mxu0 %v1502
  %1738 = vmatprep.subr.bf16.mxu0 0
  %1739 = vmatpush1.bf16.msra.mxu0 %v1503
  %1740 = vmatprep.subr.bf16.mxu0 0
  %1741 = vmatpush1.bf16.msra.mxu0 %v1504
  %1742 = vmatprep.subr.bf16.mxu0 0
  %1743 = vmatpush1.bf16.msra.mxu0 %v1505
  %1744 = vmatprep.subr.bf16.mxu0 0
  %1745 = vmatpush1.bf16.msra.mxu0 %v1506
  %1746 = vmatprep.subr.bf16.mxu0 0
  %1747 = vmatpush1.bf16.msra.mxu0 %v1507
  %1748 = vmatprep.subr.bf16.mxu0 0
  %1749 = vmatpush1.bf16.msra.mxu0 %v1508
  %1750 = vmatprep.mubr.bf16.mxu0 %v968
  %1751 = vmatmul.mubr.bf16.gmra.mrb[0].mxu0 %v950
  %v1752 = vpop.f32.mrb[0].mxu0
  %v1753 = vadd.f32 %v1656, %v1752
  %v1754 = vpop.f32.mrb[0].mxu0
  %v1755 = vpop.f32.mrb[0].mxu0
  %v1756 = vadd.f32 %v1659, %v1755
  %v1757 = vpop.f32.mrb[0].mxu0
  %1758 = vmatprep.mubr.bf16.mxu0 %v969
  %1759 = vmatmul.mubr.bf16.gmra.mrb[0].mxu0 %v951
  %v1760 = vpop.f32.mrb[0].mxu0
  %v1761 = vadd.f32 %v1664, %v1760
  %v1762 = vpop.f32.mrb[0].mxu0
  %v1763 = vpop.f32.mrb[0].mxu0
  %v1764 = vadd.f32 %v1667, %v1763
  %v1765 = vpop.f32.mrb[0].mxu0
  %1766 = vmatprep.mubr.bf16.mxu0 %v970
  %1767 = vmatmul.mubr.bf16.gmra.mrb[0].mxu0 %v952
  %v1768 = vpop.f32.mrb[0].mxu0
  %v1769 = vadd.f32 %v1672, %v1768
  %v1770 = vpop.f32.mrb[0].mxu0
  %v1771 = vpop.f32.mrb[0].mxu0
  %v1772 = vadd.f32 %v1675, %v1771
  %v1773 = vpop.f32.mrb[0].mxu0
  %1774 = vmatprep.mubr.bf16.mxu0 %v971
  %1775 = vmatmul.mubr.bf16.gmra.mrb[0].mxu0 %v953
  %v1776 = vpop.f32.mrb[0].mxu0
  %v1777 = vadd.f32 %v1680, %v1776
  %v1778 = vpop.f32.mrb[0].mxu0
  %v1779 = vpop.f32.mrb[0].mxu0
  %v1780 = vadd.f32 %v1683, %v1779
  %v1781 = vpop.f32.mrb[0].mxu0
  %1782 = vmatprep.mubr.bf16.mxu0 %v972
  %1783 = vmatmul.mubr.bf16.gmra.mrb[0].mxu0 %v954
  %v1784 = vpop.f32.mrb[0].mxu0
  %v1785 = vadd.f32 %v1688, %v1784
  %v1786 = vpop.f32.mrb[0].mxu0
  %v1787 = vpop.f32.mrb[0].mxu0
  %v1788 = vadd.f32 %v1691, %v1787
  %v1789 = vpop.f32.mrb[0].mxu0
  %1790 = vmatprep.mubr.bf16.mxu0 %v973
  %1791 = vmatmul.mubr.bf16.gmra.mrb[0].mxu0 %v955
  %v1792 = vpop.f32.mrb[0].mxu0
  %v1793 = vadd.f32 %v1696, %v1792
  %v1794 = vpop.f32.mrb[0].mxu0
  %v1795 = vpop.f32.mrb[0].mxu0
  %v1796 = vadd.f32 %v1699, %v1795
  %v1797 = vpop.f32.mrb[0].mxu0
  %1798 = vmatprep.mubr.bf16.mxu0 %v974
  %1799 = vmatmul.mubr.bf16.gmra.mrb[0].mxu0 %v956
  %v1800 = vpop.f32.mrb[0].mxu0
  %v1801 = vadd.f32 %v1704, %v1800
  %v1802 = vpop.f32.mrb[0].mxu0
  %v1803 = vpop.f32.mrb[0].mxu0
  %v1804 = vadd.f32 %v1707, %v1803
  %v1805 = vpop.f32.mrb[0].mxu0
  %1806 = vmatprep.mubr.bf16.mxu0 %v975
  %1807 = vmatmul.mubr.bf16.gmra.mrb[0].mxu0 %v957
  %v1808 = vpop.f32.mrb[0].mxu0
  %v1809 = vadd.f32 %v1712, %v1808
  %v1810 = vpop.f32.mrb[0].mxu0
  %v1811 = vpop.f32.mrb[0].mxu0
  %v1812 = vadd.f32 %v1715, %v1811
  %v1813 = vpop.f32.mrb[0].mxu0
  %1814 = vdwg.mxu0
  %1815 = vmatprep.subr.bf16.mxu0 0
  %1816 = vmatpush1.bf16.msra.mxu0 %v1509
  %1817 = vmatprep.subr.bf16.mxu0 0
  %1818 = vmatpush1.bf16.msra.mxu0 %v1510
  %1819 = vmatprep.subr.bf16.mxu0 0
  %1820 = vmatpush1.bf16.msra.mxu0 %v1511
  %1821 = vmatprep.subr.bf16.mxu0 0
  %1822 = vmatpush1.bf16.msra.mxu0 %v1512
  %1823 = vmatprep.subr.bf16.mxu0 0
  %1824 = vmatpush1.bf16.msra.mxu0 %v1513
  %1825 = vmatprep.subr.bf16.mxu0 0
  %1826 = vmatpush1.bf16.msra.mxu0 %v1514
  %1827 = vmatprep.subr.bf16.mxu0 0
  %1828 = vmatpush1.bf16.msra.mxu0 %v1515
  %1829 = vmatprep.subr.bf16.mxu0 0
  %1830 = vmatpush1.bf16.msra.mxu0 %v1516
  %1831 = vmatprep.subr.bf16.mxu0 0
  %1832 = vmatpush1.bf16.msra.mxu0 %v1517
  %1833 = vmatprep.subr.bf16.mxu0 0
  %1834 = vmatpush1.bf16.msra.mxu0 %v1518
  %1835 = vmatprep.subr.bf16.mxu0 0
  %1836 = vmatpush1.bf16.msra.mxu0 %v1519
  %1837 = vmatprep.subr.bf16.mxu0 0
  %1838 = vmatpush1.bf16.msra.mxu0 %v1520
  %1839 = vmatprep.subr.bf16.mxu0 0
  %1840 = vmatpush1.bf16.msra.mxu0 %v1521
  %1841 = vmatprep.subr.bf16.mxu0 0
  %1842 = vmatpush1.bf16.msra.mxu0 %v1522
  %1843 = vmatprep.subr.bf16.mxu0 0
  %1844 = vmatpush1.bf16.msra.mxu0 %v1523
  %1845 = vmatprep.subr.bf16.mxu0 0
  %1846 = vmatpush1.bf16.msra.mxu0 %v1524
  %1847 = vmatprep.mubr.bf16.mxu0 %v1004
  %1848 = vmatmul.mubr.bf16.gmra.mrb[0].mxu0 %v986
  %v1849 = vpop.f32.mrb[0].mxu0
  %v1850 = vadd.f32 %v1753, %v1849
  %v1851 = vpop.f32.mrb[0].mxu0
  %v1852 = vpop.f32.mrb[0].mxu0
  %v1853 = vadd.f32 %v1756, %v1852
  %v1854 = vpop.f32.mrb[0].mxu0
  %1855 = vmatprep.mubr.bf16.mxu0 %v1005
  %1856 = vmatmul.mubr.bf16.gmra.mrb[0].mxu0 %v987
  %v1857 = vpop.f32.mrb[0].mxu0
  %v1858 = vadd.f32 %v1761, %v1857
  %v1859 = vpop.f32.mrb[0].mxu0
  %v1860 = vpop.f32.mrb[0].mxu0
  %v1861 = vadd.f32 %v1764, %v1860
  %v1862 = vpop.f32.mrb[0].mxu0
  %1863 = vmatprep.mubr.bf16.mxu0 %v1006
  %1864 = vmatmul.mubr.bf16.gmra.mrb[0].mxu0 %v988
  %v1865 = vpop.f32.mrb[0].mxu0
  %v1866 = vadd.f32 %v1769, %v1865
  %v1867 = vpop.f32.mrb[0].mxu0
  %v1868 = vpop.f32.mrb[0].mxu0
  %v1869 = vadd.f32 %v1772, %v1868
  %v1870 = vpop.f32.mrb[0].mxu0
  %1871 = vmatprep.mubr.bf16.mxu0 %v1007
  %1872 = vmatmul.mubr.bf16.gmra.mrb[0].mxu0 %v989
  %v1873 = vpop.f32.mrb[0].mxu0
  %v1874 = vadd.f32 %v1777, %v1873
  %v1875 = vpop.f32.mrb[0].mxu0
  %v1876 = vpop.f32.mrb[0].mxu0
  %v1877 = vadd.f32 %v1780, %v1876
  %v1878 = vpop.f32.mrb[0].mxu0
  %1879 = vmatprep.mubr.bf16.mxu0 %v1008
  %1880 = vmatmul.mubr.bf16.gmra.mrb[0].mxu0 %v990
  %v1881 = vpop.f32.mrb[0].mxu0
  %v1882 = vadd.f32 %v1785, %v1881
  %v1883 = vpop.f32.mrb[0].mxu0
  %v1884 = vpop.f32.mrb[0].mxu0
  %v1885 = vadd.f32 %v1788, %v1884
  %v1886 = vpop.f32.mrb[0].mxu0
  %1887 = vmatprep.mubr.bf16.mxu0 %v1009
  %1888 = vmatmul.mubr.bf16.gmra.mrb[0].mxu0 %v991
  %v1889 = vpop.f32.mrb[0].mxu0
  %v1890 = vadd.f32 %v1793, %v1889
  %v1891 = vpop.f32.mrb[0].mxu0
  %v1892 = vpop.f32.mrb[0].mxu0
  %v1893 = vadd.f32 %v1796, %v1892
  %v1894 = vpop.f32.mrb[0].mxu0
  %1895 = vmatprep.mubr.bf16.mxu0 %v1010
  %1896 = vmatmul.mubr.bf16.gmra.mrb[0].mxu0 %v992
  %v1897 = vpop.f32.mrb[0].mxu0
  %v1898 = vadd.f32 %v1801, %v1897
  %v1899 = vpop.f32.mrb[0].mxu0
  %v1900 = vpop.f32.mrb[0].mxu0
  %v1901 = vadd.f32 %v1804, %v1900
  %v1902 = vpop.f32.mrb[0].mxu0
  %1903 = vmatprep.mubr.bf16.mxu0 %v1011
  %1904 = vmatmul.mubr.bf16.gmra.mrb[0].mxu0 %v993
  %v1905 = vpop.f32.mrb[0].mxu0
  %v1906 = vadd.f32 %v1809, %v1905
  %v1907 = vpop.f32.mrb[0].mxu0
  %v1908 = vpop.f32.mrb[0].mxu0
  %v1909 = vadd.f32 %v1812, %v1908
  %v1910 = vpop.f32.mrb[0].mxu0
  %1911 = vdwg.mxu0
  %1912 = vmatprep.subr.bf16.mxu0 0
  %1913 = vmatpush1.bf16.msra.mxu0 %v1525
  %1914 = vmatprep.subr.bf16.mxu0 0
  %1915 = vmatpush1.bf16.msra.mxu0 %v1526
  %1916 = vmatprep.subr.bf16.mxu0 0
  %1917 = vmatpush1.bf16.msra.mxu0 %v1527
  %1918 = vmatprep.subr.bf16.mxu0 0
  %1919 = vmatpush1.bf16.msra.mxu0 %v1528
  %1920 = vmatprep.subr.bf16.mxu0 0
  %1921 = vmatpush1.bf16.msra.mxu0 %v1529
  %1922 = vmatprep.subr.bf16.mxu0 0
  %1923 = vmatpush1.bf16.msra.mxu0 %v1530
  %1924 = vmatprep.subr.bf16.mxu0 0
  %1925 = vmatpush1.bf16.msra.mxu0 %v1531
  %1926 = vmatprep.subr.bf16.mxu0 0
  %1927 = vmatpush1.bf16.msra.mxu0 %v1532
  %1928 = vmatprep.subr.bf16.mxu0 0
  %1929 = vmatpush1.bf16.msra.mxu0 %v1533
  %1930 = vmatprep.subr.bf16.mxu0 0
  %1931 = vmatpush1.bf16.msra.mxu0 %v1534
  %1932 = vmatprep.subr.bf16.mxu0 0
  %1933 = vmatpush1.bf16.msra.mxu0 %v1535
  %1934 = vmatprep.subr.bf16.mxu0 0
  %1935 = vmatpush1.bf16.msra.mxu0 %v1536
  %1936 = vmatprep.subr.bf16.mxu0 0
  %1937 = vmatpush1.bf16.msra.mxu0 %v1537
  %1938 = vmatprep.subr.bf16.mxu0 0
  %1939 = vmatpush1.bf16.msra.mxu0 %v1538
  %1940 = vmatprep.subr.bf16.mxu0 0
  %1941 = vmatpush1.bf16.msra.mxu0 %v1539
  %1942 = vmatprep.subr.bf16.mxu0 0
  %1943 = vmatpush1.bf16.msra.mxu0 %v1540
  %1944 = vmatprep.mubr.bf16.mxu0 %v919
  %1945 = vmatmul.mubr.bf16.gmra.mrb[0].mxu0 %v887
  %v1946 = vpop.f32.mrb[0].mxu0
  %v1947 = vadd.f32 %v1850, %v1946
  %v1948 = vpop.f32.mrb[0].mxu0
  %v1949 = vpop.f32.mrb[0].mxu0
  %v1950 = vadd.f32 %v1853, %v1949
  %v1951 = vpop.f32.mrb[0].mxu0
  %1952 = vmatprep.mubr.bf16.mxu0 %v920
  %1953 = vmatmul.mubr.bf16.gmra.mrb[0].mxu0 %v888
  %v1954 = vpop.f32.mrb[0].mxu0
  %v1955 = vadd.f32 %v1858, %v1954
  %v1956 = vpop.f32.mrb[0].mxu0
  %v1957 = vpop.f32.mrb[0].mxu0
  %v1958 = vadd.f32 %v1861, %v1957
  %v1959 = vpop.f32.mrb[0].mxu0
  %1960 = vmatprep.mubr.bf16.mxu0 %v921
  %1961 = vmatmul.mubr.bf16.gmra.mrb[0].mxu0 %v889
  %v1962 = vpop.f32.mrb[0].mxu0
  %v1963 = vadd.f32 %v1866, %v1962
  %v1964 = vpop.f32.mrb[0].mxu0
  %v1965 = vpop.f32.mrb[0].mxu0
  %v1966 = vadd.f32 %v1869, %v1965
  %v1967 = vpop.f32.mrb[0].mxu0
  %1968 = vmatprep.mubr.bf16.mxu0 %v1028
  %1969 = vmatmul.mubr.bf16.gmra.mrb[0].mxu0 %v1022
  %v1970 = vpop.f32.mrb[0].mxu0
  %v1971 = vadd.f32 %v1874, %v1970
  %v1972 = vpop.f32.mrb[0].mxu0
  %v1973 = vpop.f32.mrb[0].mxu0
  %v1974 = vadd.f32 %v1877, %v1973
  %v1975 = vpop.f32.mrb[0].mxu0
  %1976 = vmatprep.mubr.bf16.mxu0 %v923
  %1977 = vmatmul.mubr.bf16.gmra.mrb[0].mxu0 %v891
  %v1978 = vpop.f32.mrb[0].mxu0
  %v1979 = vadd.f32 %v1882, %v1978
  %v1980 = vpop.f32.mrb[0].mxu0
  %v1981 = vpop.f32.mrb[0].mxu0
  %v1982 = vadd.f32 %v1885, %v1981
  %v1983 = vpop.f32.mrb[0].mxu0
  %1984 = vmatprep.mubr.bf16.mxu0 %v924
  %1985 = vmatmul.mubr.bf16.gmra.mrb[0].mxu0 %v892
  %v1986 = vpop.f32.mrb[0].mxu0
  %v1987 = vadd.f32 %v1890, %v1986
  %v1988 = vpop.f32.mrb[0].mxu0
  %v1989 = vpop.f32.mrb[0].mxu0
  %v1990 = vadd.f32 %v1893, %v1989
  %v1991 = vpop.f32.mrb[0].mxu0
  %1992 = vmatprep.mubr.bf16.mxu0 %v925
  %1993 = vmatmul.mubr.bf16.gmra.mrb[0].mxu0 %v893
  %v1994 = vpop.f32.mrb[0].mxu0
  %v1995 = vadd.f32 %v1898, %v1994
  %v1996 = vpop.f32.mrb[0].mxu0
  %v1997 = vpop.f32.mrb[0].mxu0
  %v1998 = vadd.f32 %v1901, %v1997
  %v1999 = vpop.f32.mrb[0].mxu0
  %2000 = vmatprep.mubr.bf16.mxu0 %v1029
  %2001 = vmatmul.mubr.bf16.gmra.mrb[0].mxu0 %v1023
  %v2002 = vpop.f32.mrb[0].mxu0
  %v2003 = vadd.f32 %v1906, %v2002
  %v2004 = vpop.f32.mrb[0].mxu0
  %v2005 = vpop.f32.mrb[0].mxu0
  %v2006 = vadd.f32 %v1909, %v2005
  %v2007 = vpop.f32.mrb[0].mxu0
  %2008 = vdwg.mxu0
  %2009 = vmatprep.subr.bf16.mxu0 0
  %2010 = vmatpush1.bf16.msra.mxu0 %v1541
  %2011 = vmatprep.subr.bf16.mxu0 0
  %2012 = vmatpush1.bf16.msra.mxu0 %v1542
  %2013 = vmatprep.subr.bf16.mxu0 0
  %2014 = vmatpush1.bf16.msra.mxu0 %v1543
  %2015 = vmatprep.subr.bf16.mxu0 0
  %2016 = vmatpush1.bf16.msra.mxu0 %v1544
  %2017 = vmatprep.subr.bf16.mxu0 0
  %2018 = vmatpush1.bf16.msra.mxu0 %v1545
  %2019 = vmatprep.subr.bf16.mxu0 0
  %2020 = vmatpush1.bf16.msra.mxu0 %v1546
  %2021 = vmatprep.subr.bf16.mxu0 0
  %2022 = vmatpush1.bf16.msra.mxu0 %v1547
  %2023 = vmatprep.subr.bf16.mxu0 0
  %2024 = vmatpush1.bf16.msra.mxu0 %v1548
  %2025 = vmatprep.subr.bf16.mxu0 0
  %2026 = vmatpush1.bf16.msra.mxu0 0
  %2027 = vmatprep.subr.bf16.mxu0 0
  %2028 = vmatpush1.bf16.msra.mxu0 0
  %2029 = vmatprep.subr.bf16.mxu0 0
  %2030 = vmatpush1.bf16.msra.mxu0 0
  %2031 = vmatprep.subr.bf16.mxu0 0
  %2032 = vmatpush1.bf16.msra.mxu0 0
  %2033 = vmatprep.subr.bf16.mxu0 0
  %2034 = vmatpush1.bf16.msra.mxu0 0
  %2035 = vmatprep.subr.bf16.mxu0 0
  %2036 = vmatpush1.bf16.msra.mxu0 0
  %2037 = vmatprep.subr.bf16.mxu0 0
  %2038 = vmatpush1.bf16.msra.mxu0 0
  %2039 = vmatprep.subr.bf16.mxu0 0
  %2040 = vmatpush1.bf16.msra.mxu0 0
  %2041 = vmatprep.mubr.bf16.mxu0 0
  %2042 = vmatmul.mubr.bf16.gmra.mrb[0].mxu0 %v951
  %v2043 = vpop.f32.mrb[0].mxu0
  %v2044 = vadd.f32 %v1947, %v2043
  %v2045 = vpop.f32.mrb[0].mxu0
  %v2046 = vpop.f32.mrb[0].mxu0
  %v2047 = vadd.f32 %v1950, %v2046
  %v2048 = vpop.f32.mrb[0].mxu0
  %2049 = vmatprep.mubr.bf16.mxu0 0
  %2050 = vmatmul.mubr.bf16.gmra.mrb[0].mxu0 %v952
  %v2051 = vpop.f32.mrb[0].mxu0
  %v2052 = vadd.f32 %v1955, %v2051
  %v2053 = vpop.f32.mrb[0].mxu0
  %v2054 = vpop.f32.mrb[0].mxu0
  %v2055 = vadd.f32 %v1958, %v2054
  %v2056 = vpop.f32.mrb[0].mxu0
  %2057 = vmatprep.mubr.bf16.mxu0 0
  %2058 = vmatmul.mubr.bf16.gmra.mrb[0].mxu0 %v953
  %v2059 = vpop.f32.mrb[0].mxu0
  %v2060 = vadd.f32 %v1963, %v2059
  %v2061 = vpop.f32.mrb[0].mxu0
  %v2062 = vpop.f32.mrb[0].mxu0
  %v2063 = vadd.f32 %v1966, %v2062
  %v2064 = vpop.f32.mrb[0].mxu0
  %2065 = vmatprep.mubr.bf16.mxu0 0
  %2066 = vmatmul.mubr.bf16.gmra.mrb[0].mxu0 %v1034
  %v2067 = vpop.f32.mrb[0].mxu0
  %v2068 = vadd.f32 %v1971, %v2067
  %v2069 = vpop.f32.mrb[0].mxu0
  %v2070 = vpop.f32.mrb[0].mxu0
  %v2071 = vadd.f32 %v1974, %v2070
  %v2072 = vpop.f32.mrb[0].mxu0
  %2073 = vmatprep.mubr.bf16.mxu0 0
  %2074 = vmatmul.mubr.bf16.gmra.mrb[0].mxu0 %v955
  %v2075 = vpop.f32.mrb[0].mxu0
  %v2076 = vadd.f32 %v1979, %v2075
  %v2077 = vpop.f32.mrb[0].mxu0
  %v2078 = vpop.f32.mrb[0].mxu0
  %v2079 = vadd.f32 %v1982, %v2078
  %v2080 = vpop.f32.mrb[0].mxu0
  %2081 = vmatprep.mubr.bf16.mxu0 0
  %2082 = vmatmul.mubr.bf16.gmra.mrb[0].mxu0 %v956
  %v2083 = vpop.f32.mrb[0].mxu0
  %v2084 = vadd.f32 %v1987, %v2083
  %v2085 = vpop.f32.mrb[0].mxu0
  %v2086 = vpop.f32.mrb[0].mxu0
  %v2087 = vadd.f32 %v1990, %v2086
  %v2088 = vpop.f32.mrb[0].mxu0
  %2089 = vmatprep.mubr.bf16.mxu0 0
  %2090 = vmatmul.mubr.bf16.gmra.mrb[0].mxu0 %v957
  %v2091 = vpop.f32.mrb[0].mxu0
  %v2092 = vadd.f32 %v1995, %v2091
  %v2093 = vpop.f32.mrb[0].mxu0
  %v2094 = vpop.f32.mrb[0].mxu0
  %v2095 = vadd.f32 %v1998, %v2094
  %v2096 = vpop.f32.mrb[0].mxu0
  %2097 = vmatprep.mubr.bf16.mxu0 0
  %2098 = vmatmul.mubr.bf16.gmra.mrb[0].mxu0 %v1035
  %v2099 = vpop.f32.mrb[0].mxu0
  %v2100 = vadd.f32 %v2003, %v2099
  %v2101 = vpop.f32.mrb[0].mxu0
  %v2102 = vpop.f32.mrb[0].mxu0
  %v2103 = vadd.f32 %v2006, %v2102
  %v2104 = vpop.f32.mrb[0].mxu0
  %2105 = vdwg.mxu0
  %v2106 = vmax.f32 %v2044, 0.0
  %v2107 = vmax.f32 %v2047, 0.0
  %v2108 = vmax.f32 %v2052, 0.0
  %v2109 = vmax.f32 %v2055, 0.0
  %v2110 = vmax.f32 %v2060, 0.0
  %v2111 = vmax.f32 %v2063, 0.0
  %v2112 = vmax.f32 %v2068, 0.0
  %v2113 = vmax.f32 %v2071, 0.0
  %v2114 = vmax.f32 %v2076, 0.0
  %v2115 = vmax.f32 %v2079, 0.0
  %v2116 = vmax.f32 %v2084, 0.0
  %v2117 = vmax.f32 %v2087, 0.0
  %v2118 = vmax.f32 %v2092, 0.0
  %v2119 = vmax.f32 %v2095, 0.0
  %v2120 = vmax.f32 %v2100, 0.0
  %v2121 = vmax.f32 %v2103, 0.0
  %v2122 = vpack.c.bf16 %v2107, %v2106
  %v2123 = vpack.c.bf16 %v2109, %v2108
  %v2124 = vpack.c.bf16 %v2111, %v2110
  %v2125 = vpack.c.bf16 %v2113, %v2112
  %v2126 = vpack.c.bf16 %v2115, %v2114
  %v2127 = vpack.c.bf16 %v2117, %v2116
  %v2128 = vpack.c.bf16 %v2119, %v2118
  %v2129 = vpack.c.bf16 %v2121, %v2120
  %v2130 = vld [vmem:[%s3] sm:$0xf]
  %v2131 = vld [vmem:[%s3 + $0x4] sm:$0xf]
  %v2132 = vld [vmem:[%s3 + $0x8] sm:$0xf]
  %v2133 = vld [vmem:[%s3 + $0xc] sm:$0xf]
  %v2134 = vld [vmem:[%s3 + $0x10] sm:$0xf]
  %v2135 = vld [vmem:[%s3 + $0x14] sm:$0xf]
  %v2136 = vld [vmem:[%s3 + $0x18] sm:$0xf]
  %v2137 = vld [vmem:[%s3 + $0x1c] sm:$0xf]
  %v2138 = vld [vmem:[%s3 + $0x20] sm:$0xf]
  %v2139 = vld [vmem:[%s3 + $0x24] sm:$0xf]
  %v2140 = vld [vmem:[%s3 + $0x28] sm:$0xf]
  %v2141 = vld [vmem:[%s3 + $0x2c] sm:$0xf]
  %v2142 = vld [vmem:[%s3 + $0x30] sm:$0xf]
  %v2143 = vld [vmem:[%s3 + $0x34] sm:$0xf]
  %v2144 = vld [vmem:[%s3 + $0x38] sm:$0xf]
  %v2145 = vld [vmem:[%s3 + $0x3c] sm:$0xf]
  %v2146 = vld [vmem:[%s4] sm:$0x1]
  %v2148 = vlaneseq
  %v2149 = vshrl.u32 %v2148, 7
  %v2150 = vsub.s32 0, %v2149
  %v2151 = vrot.slane %v2146, %v2150
  %v2169 = vunpack.c.l.b16 %v2130
  %v2170 = vunpack.c.l.b16 %v2131
  %v2171 = vunpack.c.l.b16 %v2132
  %v2172 = vunpack.c.l.b16 %v2133
  %v2173 = vunpack.c.l.b16 %v2134
  %v2174 = vunpack.c.l.b16 %v2135
  %v2175 = vunpack.c.l.b16 %v2136
  %v2176 = vunpack.c.l.b16 %v2137
  %v2177 = vunpack.c.l.b16 %v2138
  %v2178 = vunpack.c.l.b16 %v2139
  %v2179 = vunpack.c.l.b16 %v2140
  %v2180 = vunpack.c.l.b16 %v2141
  %v2181 = vunpack.c.l.b16 %v2142
  %v2182 = vunpack.c.l.b16 %v2143
  %v2183 = vunpack.c.l.b16 %v2144
  %v2184 = vunpack.c.l.b16 %v2145
  %v2185 = vpack.c.b16 %v2170, %v2169
  %v2186 = vpack.c.b16 %v2172, %v2171
  %v2187 = vpack.c.b16 %v2174, %v2173
  %v2188 = vpack.c.b16 %v2176, %v2175
  %v2189 = vpack.c.b16 %v2178, %v2177
  %v2190 = vpack.c.b16 %v2180, %v2179
  %v2191 = vpack.c.b16 %v2182, %v2181
  %v2192 = vpack.c.b16 %v2184, %v2183
  %2201 = vmatprep.subr.bf16.mxu0 0
  %2202 = vmatpush1.bf16.msra.mxu0 %v2185
  %2203 = vmatprep.subr.bf16.mxu0 0
  %2204 = vmatpush1.bf16.msra.mxu0 %v2186
  %2205 = vmatprep.subr.bf16.mxu0 0
  %2206 = vmatpush1.bf16.msra.mxu0 %v2187
  %2207 = vmatprep.subr.bf16.mxu0 0
  %2208 = vmatpush1.bf16.msra.mxu0 %v2188
  %2209 = vmatprep.subr.bf16.mxu0 0
  %2210 = vmatpush1.bf16.msra.mxu0 %v2189
  %2211 = vmatprep.subr.bf16.mxu0 0
  %2212 = vmatpush1.bf16.msra.mxu0 %v2190
  %2213 = vmatprep.subr.bf16.mxu0 0
  %2214 = vmatpush1.bf16.msra.mxu0 %v2191
  %2215 = vmatprep.subr.bf16.mxu0 0
  %2216 = vmatpush1.bf16.msra.mxu0 %v2192
  %2217 = vmatprep.subr.bf16.mxu0 0
  %2218 = vmatpush1.bf16.msra.mxu0 0
  %2219 = vmatprep.subr.bf16.mxu0 0
  %2220 = vmatpush1.bf16.msra.mxu0 0
  %2221 = vmatprep.subr.bf16.mxu0 0
  %2222 = vmatpush1.bf16.msra.mxu0 0
  %2223 = vmatprep.subr.bf16.mxu0 0
  %2224 = vmatpush1.bf16.msra.mxu0 0
  %2225 = vmatprep.subr.bf16.mxu0 0
  %2226 = vmatpush1.bf16.msra.mxu0 0
  %2227 = vmatprep.subr.bf16.mxu0 0
  %2228 = vmatpush1.bf16.msra.mxu0 0
  %2229 = vmatprep.subr.bf16.mxu0 0
  %2230 = vmatpush1.bf16.msra.mxu0 0
  %2231 = vmatprep.subr.bf16.mxu0 0
  %2232 = vmatpush1.bf16.msra.mxu0 0
  %2233 = vmatprep.mubr.bf16.mxu0 0
  %2234 = vmatmul.mubr.bf16.gmra.mrb[0].mxu0 %v2122
  %v2235 = vpop.f32.mrb[0].mxu0
  %v2236 = vadd.f32 %v2151, %v2235
  %v2237 = vpop.f32.mrb[0].mxu0
  %v2238 = vpop.f32.mrb[0].mxu0
  %v2239 = vadd.f32 %v2151, %v2238
  %v2240 = vpop.f32.mrb[0].mxu0
  %2241 = vmatprep.mubr.bf16.mxu0 0
  %2242 = vmatmul.mubr.bf16.gmra.mrb[0].mxu0 %v2123
  %v2243 = vpop.f32.mrb[0].mxu0
  %v2244 = vadd.f32 %v2151, %v2243
  %v2245 = vpop.f32.mrb[0].mxu0
  %v2246 = vpop.f32.mrb[0].mxu0
  %v2247 = vadd.f32 %v2151, %v2246
  %v2248 = vpop.f32.mrb[0].mxu0
  %2249 = vmatprep.mubr.bf16.mxu0 0
  %2250 = vmatmul.mubr.bf16.gmra.mrb[0].mxu0 %v2124
  %v2251 = vpop.f32.mrb[0].mxu0
  %v2252 = vadd.f32 %v2151, %v2251
  %v2253 = vpop.f32.mrb[0].mxu0
  %v2254 = vpop.f32.mrb[0].mxu0
  %v2255 = vadd.f32 %v2151, %v2254
  %v2256 = vpop.f32.mrb[0].mxu0
  %2257 = vmatprep.mubr.bf16.mxu0 0
  %2258 = vmatmul.mubr.bf16.gmra.mrb[0].mxu0 %v2125
  %v2259 = vpop.f32.mrb[0].mxu0
  %v2260 = vadd.f32 %v2151, %v2259
  %v2261 = vpop.f32.mrb[0].mxu0
  %v2262 = vpop.f32.mrb[0].mxu0
  %v2263 = vadd.f32 %v2151, %v2262
  %v2264 = vpop.f32.mrb[0].mxu0
  %2265 = vmatprep.mubr.bf16.mxu0 0
  %2266 = vmatmul.mubr.bf16.gmra.mrb[0].mxu0 %v2126
  %v2267 = vpop.f32.mrb[0].mxu0
  %v2268 = vadd.f32 %v2151, %v2267
  %v2269 = vpop.f32.mrb[0].mxu0
  %v2270 = vpop.f32.mrb[0].mxu0
  %v2271 = vadd.f32 %v2151, %v2270
  %v2272 = vpop.f32.mrb[0].mxu0
  %2273 = vmatprep.mubr.bf16.mxu0 0
  %2274 = vmatmul.mubr.bf16.gmra.mrb[0].mxu0 %v2127
  %v2275 = vpop.f32.mrb[0].mxu0
  %v2276 = vadd.f32 %v2151, %v2275
  %v2277 = vpop.f32.mrb[0].mxu0
  %v2278 = vpop.f32.mrb[0].mxu0
  %v2279 = vadd.f32 %v2151, %v2278
  %v2280 = vpop.f32.mrb[0].mxu0
  %2281 = vmatprep.mubr.bf16.mxu0 0
  %2282 = vmatmul.mubr.bf16.gmra.mrb[0].mxu0 %v2128
  %v2283 = vpop.f32.mrb[0].mxu0
  %v2284 = vadd.f32 %v2151, %v2283
  %v2285 = vpop.f32.mrb[0].mxu0
  %v2286 = vpop.f32.mrb[0].mxu0
  %v2287 = vadd.f32 %v2151, %v2286
  %v2288 = vpop.f32.mrb[0].mxu0
  %2289 = vmatprep.mubr.bf16.mxu0 0
  %2290 = vmatmul.mubr.bf16.gmra.mrb[0].mxu0 %v2129
  %v2291 = vpop.f32.mrb[0].mxu0
  %v2292 = vadd.f32 %v2151, %v2291
  %v2293 = vpop.f32.mrb[0].mxu0
  %v2294 = vpop.f32.mrb[0].mxu0
  %v2295 = vadd.f32 %v2151, %v2294
  %v2296 = vpop.f32.mrb[0].mxu0
  %2297 = vdwg.mxu0
  %v2298 = vadd.f32 %v65, %v2236
  %v2299 = vadd.f32 %v66, %v2239
  %v2300 = vadd.f32 %v67, %v2244
  %v2301 = vadd.f32 %v68, %v2247
  %v2302 = vadd.f32 %v69, %v2252
  %v2303 = vadd.f32 %v70, %v2255
  %v2304 = vadd.f32 %v71, %v2260
  %v2305 = vadd.f32 %v72, %v2263
  %v2306 = vadd.f32 %v73, %v2268
  %v2307 = vadd.f32 %v74, %v2271
  %v2308 = vadd.f32 %v75, %v2276
  %v2309 = vadd.f32 %v76, %v2279
  %v2310 = vadd.f32 %v77, %v2284
  %v2311 = vadd.f32 %v78, %v2287
  %v2312 = vadd.f32 %v79, %v2292
  %v2313 = vadd.f32 %v80, %v2295
  %2314 = vst [vmem:[%s5] sm:$0xff] %v2298
  %2315 = vst [vmem:[%s5 + $0x8] sm:$0xff] %v2299
  %2316 = vst [vmem:[%s5 + $0x10] sm:$0xff] %v2300
  %2317 = vst [vmem:[%s5 + $0x18] sm:$0xff] %v2301
  %2318 = vst [vmem:[%s5 + $0x20] sm:$0xff] %v2302
  %2319 = vst [vmem:[%s5 + $0x28] sm:$0xff] %v2303
  %2320 = vst [vmem:[%s5 + $0x30] sm:$0xff] %v2304
  %2321 = vst [vmem:[%s5 + $0x38] sm:$0xff] %v2305
  %2322 = vst [vmem:[%s5 + $0x40] sm:$0xff] %v2306
  %2323 = vst [vmem:[%s5 + $0x48] sm:$0xff] %v2307
  %2324 = vst [vmem:[%s5 + $0x50] sm:$0xff] %v2308
  %2325 = vst [vmem:[%s5 + $0x58] sm:$0xff] %v2309
  %2326 = vst [vmem:[%s5 + $0x60] sm:$0xff] %v2310
  %2327 = vst [vmem:[%s5 + $0x68] sm:$0xff] %v2311
  %2328 = vst [vmem:[%s5 + $0x70] sm:$0xff] %v2312
  %2329 = vst [vmem:[%s5 + $0x78] sm:$0xff] %v2313
  // Predicated region
  $region26: #{resblock_pallas.1} parent=0 // pred_check
    _
  $region27: #{resblock_pallas.1} parent=0 // pred_check_branch
    %2331 = sbr.rel (0) target = $region29
  $region28: #{resblock_pallas.1} parent=0 // pred_region
    _
  $region29: #{resblock_pallas.1} parent=0 // pred_fallthru
    _
  // Predicated region
  $region30: #{resblock_pallas.1} parent=0 // pred_check
    _
  $region31: #{resblock_pallas.1} parent=0 // pred_check_branch
    %2333 = sbr.rel (0) target = $region33
  $region32: #{resblock_pallas.1} parent=0 // pred_region
    _
  $region33: #{resblock_pallas.1} parent=0 // pred_fallthru
    _

</llo_original>
